<compile_context>
chip_gen: v7x
topology: tpu7x:2x2x1
jax: 0.10.0
libtpu: 0.0.40
codegen_flags: <defaults>
</compile_context>

<pallas_src>
import math

import jax
import jax.numpy as jnp
from jax.experimental import pallas as pl
from jax.experimental.pallas import tpu as pltpu

LANE = 128


def _round_up(x, m):
    return (x + m - 1) // m * m


def dynamics_mlp_kernel(x_ref, w1_ref, b1_ref, w2_ref, b2_ref,
                        w3_ref, b3_ref, o_ref):
    # fc1 + relu  (single K=16 GEMM over the fused [state, action] input)
    x = x_ref[...].astype(jnp.bfloat16)
    h1 = jnp.dot(x, w1_ref[...], preferred_element_type=jnp.float32) + b1_ref[...]
    h1 = jnp.maximum(h1, 0.0)

    # fc2 + relu
    h2 = jnp.dot(h1.astype(jnp.bfloat16), w2_ref[...],
                 preferred_element_type=jnp.float32) + b2_ref[...]
    h2 = jnp.maximum(h2, 0.0)

    # output head (lane-dense, zero-padded to 128 columns; no activation)
    out = jnp.dot(h2.astype(jnp.bfloat16), w3_ref[...],
                  preferred_element_type=jnp.float32) + b3_ref[...]
    o_ref[...] = out.astype(o_ref.dtype)


def _chip_info():
    """(#TensorCores per chip, MXU M-tile) guessed from the device kind."""
    kind = ""
    try:
        kind = jax.devices()[0].device_kind.lower()
    except Exception:
        pass
    n_tc = 2 if ("v7" in kind or "tpu7" in kind) else 1
    m_align = 128 if "v5" in kind else 256        # v5e MXU is 4x128^2
    return n_tc, m_align


def _pick_tiling(B, *, cap=1024):
    """Pick (batch tile tm, padded batch B_pad).

    Keeps the grid as short as possible (each grid step is ~0.35us of serial
    pipeline overhead on a 1-TC chip); on v7x with a big batch, makes the grid
    length a multiple of 2 with MXU-M-aligned tiles so both cores are busy.
    """
    n_tc, m_align = _chip_info()
    B8 = _round_up(B, 8)                          # sublane multiple
    if n_tc == 1 or B8 <= 512:
        # Single grid step whenever the whole batch fits under the cap; on
        # v7x a small batch is not worth the duplicated weight DMA + prologue.
        tm = min(B8, cap)
    else:
        tm = min(cap, _round_up(-(-B8 // n_tc), m_align))
    B_pad = _round_up(B8, tm)
    return tm, B_pad


def dynamics_forward(state, action, params, *, single_buffer_weights=True):
    """Pallas equivalent of DynamicsModel.forward(state, action)."""
    w1, b1, w2, b2, w3p, b3p = params
    B, state_size = state.shape
    in_dims, fc1_dims = w1.shape
    fc2_dims = w2.shape[1]
    out_pad = w3p.shape[1]

    # Fuse concat([state, action], dim=1) here: ~B*16 f32, negligible HBM
    # traffic, and it turns layer 1 into a single K=16 MXU pass.
    x = jnp.concatenate([state, action], axis=1)

    tm, B_pad = _pick_tiling(B)
    if B_pad != B:
        # Pad only the tiny fused (B, 16) input (and only when B isn't a
        # multiple of 8 / overflows the tile cap), not state/action separately.
        x = jnp.pad(x, ((0, B_pad - B), (0, 0)))
    grid = (B_pad // tm,)

    if single_buffer_weights:
        def resident(shape):
            # Constant block index -> never re-fetched; one VMEM copy suffices.
            return pl.BlockSpec(shape, lambda i: (0, 0),
                                pipeline_mode=pl.Buffered(1))
    else:
        def resident(shape):
            return pl.BlockSpec(shape, lambda i: (0, 0))

    flops = 2 * B_pad * (in_dims * fc1_dims + fc1_dims * fc2_dims
                         + fc2_dims * out_pad)
    bytes_accessed = (x.size * 4 + B_pad * out_pad * 4
                      + (w1.size + w2.size + w3p.size) * 2
                      + (b1.size + b2.size + b3p.size) * 4)

    out = pl.pallas_call(
        dynamics_mlp_kernel,
        out_shape=jax.ShapeDtypeStruct((B_pad, out_pad), jnp.float32),
        grid=grid,
        in_specs=[
            pl.BlockSpec((tm, in_dims), lambda i: (i, 0)),
            resident(w1.shape), resident(b1.shape),
            resident(w2.shape), resident(b2.shape),
            resident(w3p.shape), resident(b3p.shape),
        ],
        out_specs=pl.BlockSpec((tm, out_pad), lambda i: (i, 0)),
        compiler_params=pltpu.CompilerParams(
            dimension_semantics=("parallel",)),
        cost_estimate=pl.CostEstimate(
            flops=flops, transcendentals=0, bytes_accessed=bytes_accessed),
    )(x, w1, b1, w2, b2, w3p, b3p)

    # Slice away batch padding and the lane-padded output columns.
    return out[:B, :state_size]


def init_params(key, state_size, action_size, fc1_dims=256, fc2_dims=256):
    """PyTorch-nn.Linear-style init (U[-1/sqrt(fan_in), 1/sqrt(fan_in)]).
    Weights stored transposed (in, out); fc1 acts on the fused [state, action]
    input; weights kept in bf16, biases in f32; output head zero-padded to a
    lane-dense 128 columns."""
    def linear(k, fan_in, fan_out):
        kw, kb = jax.random.split(k)
        bound = 1.0 / math.sqrt(fan_in)
        w = jax.random.uniform(kw, (fan_in, fan_out), jnp.float32, -bound, bound)
        b = jax.random.uniform(kb, (1, fan_out), jnp.float32, -bound, bound)
        return w, b

    k1, k2, k3 = jax.random.split(key, 3)
    w1, b1 = linear(k1, state_size + action_size, fc1_dims)
    w2, b2 = linear(k2, fc1_dims, fc2_dims)
    w3, b3 = linear(k3, fc2_dims, state_size)

    out_pad = _round_up(max(state_size, LANE), LANE)
    w3p = jnp.zeros((fc2_dims, out_pad), jnp.float32).at[:, :state_size].set(w3)
    b3p = jnp.zeros((1, out_pad), jnp.float32).at[:, :state_size].set(b3)

    return (w1.astype(jnp.bfloat16), b1,
            w2.astype(jnp.bfloat16), b2,
            w3p.astype(jnp.bfloat16), b3p)


# TODO(synk): learn_from_batch (Adam update + MSE backward) is a training step
# and is not translated; only the forward pass is implemented here.

if __name__ == "__main__":
    state_size = 12
    action_size = 4
    batch = 256  # -> one 256-row tile, grid=(1,) (no per-step pipeline overhead)

    key = jax.random.PRNGKey(0)
    k_params, k_state, k_action = jax.random.split(key, 3)

    params = init_params(k_params, state_size, action_size)
    state = jax.random.normal(k_state, (batch, state_size), jnp.float32)
    action = jax.random.normal(k_action, (batch, action_size), jnp.float32)

    try:
        new_state = dynamics_forward(state, action, params)
        jax.block_until_ready(new_state)
    except Exception:
        # Some jax versions reject pipeline_mode=pl.Buffered(1) on the
        # top-level pallas_call pipeline; fall back to default double-buffered
        # resident weight blocks (identical semantics, slightly more VMEM).
        new_state = dynamics_forward(state, action, params,
                                     single_buffer_weights=False)
        jax.block_until_ready(new_state)

    # Pure-JAX reference using the same bf16-weight / f32-accumulate arithmetic.
    w1, b1, w2, b2, w3p, b3p = params
    x = jnp.concatenate([state, action], axis=1).astype(jnp.bfloat16)
    h1 = jnp.maximum(
        jnp.dot(x, w1, preferred_element_type=jnp.float32) + b1, 0.0)
    h2 = jnp.maximum(
        jnp.dot(h1.astype(jnp.bfloat16), w2, preferred_element_type=jnp.float32)
        + b2, 0.0)
    ref = (jnp.dot(h2.astype(jnp.bfloat16), w3p, preferred_element_type=jnp.float32)
           + b3p)[:, :state_size]

    assert new_state.shape == (batch, state_size)
    assert jnp.allclose(new_state, ref, atol=1e-2, rtol=1e-2), \
        float(jnp.max(jnp.abs(new_state - ref)))

    print("KERNEL_OK")
</pallas_src>

<mosaic_0001>
module attributes {stable_mosaic.version = 11 : i64} {
  func.func @dynamics_mlp_kernel(%arg0: i32, %arg1: memref<256x16xf32, #tpu.memory_space<vmem>>, %arg2: memref<16x256xbf16, #tpu.memory_space<vmem>>, %arg3: memref<1x256xf32, #tpu.memory_space<vmem>>, %arg4: memref<256x256xbf16, #tpu.memory_space<vmem>>, %arg5: memref<1x256xf32, #tpu.memory_space<vmem>>, %arg6: memref<256x128xbf16, #tpu.memory_space<vmem>>, %arg7: memref<1x128xf32, #tpu.memory_space<vmem>>, %arg8: memref<256x128xf32, #tpu.memory_space<vmem>>) attributes {dimension_semantics = [#tpu.dimension_semantics<parallel>], iteration_bounds = array<i64: 1>, scalar_prefetch = 0 : i64, scratch_operands = 0 : i64, tpu.core_type = #tpu.core_type<tc>, window_params = [{transform_indices = @transform_0, window_bounds = array<i64: 256, 16>}, {pipeline_mode = #tpu.pipeline_mode<synchronous>, transform_indices = @transform_1, window_bounds = array<i64: 16, 256>}, {pipeline_mode = #tpu.pipeline_mode<synchronous>, transform_indices = @transform_2, window_bounds = array<i64: 1, 256>}, {pipeline_mode = #tpu.pipeline_mode<synchronous>, transform_indices = @transform_3, window_bounds = array<i64: 256, 256>}, {pipeline_mode = #tpu.pipeline_mode<synchronous>, transform_indices = @transform_4, window_bounds = array<i64: 1, 256>}, {pipeline_mode = #tpu.pipeline_mode<synchronous>, transform_indices = @transform_5, window_bounds = array<i64: 256, 128>}, {pipeline_mode = #tpu.pipeline_mode<synchronous>, transform_indices = @transform_6, window_bounds = array<i64: 1, 128>}, {transform_indices = @transform_7, window_bounds = array<i64: 256, 128>}]} {
    %c0 = arith.constant 0 : index
    %c0_0 = arith.constant 0 : index
    %0 = vector.load %arg1[%c0, %c0_0] : memref<256x16xf32, #tpu.memory_space<vmem>>, vector<256x16xf32>
    %1 = arith.truncf %0 : vector<256x16xf32> to vector<256x16xbf16>
    %c0_1 = arith.constant 0 : index
    %c0_2 = arith.constant 0 : index
    %2 = vector.load %arg2[%c0_1, %c0_2] : memref<16x256xbf16, #tpu.memory_space<vmem>>, vector<16x256xbf16>
    %cst = arith.constant dense<0.000000e+00> : vector<256x256xf32>
    %3 = tpu.matmul %1, %2, %cst {dimension_numbers = #tpu.dot_dimension_numbers<[1], [0], [0], [1], [0, 0, 1, 1], [], []>} : vector<256x16xbf16>, vector<16x256xbf16>, vector<256x256xf32> -> vector<256x256xf32>
    %c0_3 = arith.constant 0 : index
    %c0_4 = arith.constant 0 : index
    %4 = vector.load %arg3[%c0_3, %c0_4] : memref<1x256xf32, #tpu.memory_space<vmem>>, vector<1x256xf32>
    %5 = vector.broadcast %4 : vector<1x256xf32> to vector<256x256xf32>
    %6 = arith.addf %3, %5 : vector<256x256xf32>
    %cst_5 = arith.constant 0.000000e+00 : f32
    %7 = vector.broadcast %cst_5 : f32 to vector<256x256xf32>
    %8 = arith.maximumf %6, %7 : vector<256x256xf32>
    %9 = arith.truncf %8 : vector<256x256xf32> to vector<256x256xbf16>
    %c0_6 = arith.constant 0 : index
    %c0_7 = arith.constant 0 : index
    %10 = vector.load %arg4[%c0_6, %c0_7] : memref<256x256xbf16, #tpu.memory_space<vmem>>, vector<256x256xbf16>
    %cst_8 = arith.constant dense<0.000000e+00> : vector<256x256xf32>
    %11 = tpu.matmul %9, %10, %cst_8 {dimension_numbers = #tpu.dot_dimension_numbers<[1], [0], [0], [1], [0, 0, 1, 1], [], []>} : vector<256x256xbf16>, vector<256x256xbf16>, vector<256x256xf32> -> vector<256x256xf32>
    %c0_9 = arith.constant 0 : index
    %c0_10 = arith.constant 0 : index
    %12 = vector.load %arg5[%c0_9, %c0_10] : memref<1x256xf32, #tpu.memory_space<vmem>>, vector<1x256xf32>
    %13 = vector.broadcast %12 : vector<1x256xf32> to vector<256x256xf32>
    %14 = arith.addf %11, %13 : vector<256x256xf32>
    %cst_11 = arith.constant 0.000000e+00 : f32
    %15 = vector.broadcast %cst_11 : f32 to vector<256x256xf32>
    %16 = arith.maximumf %14, %15 : vector<256x256xf32>
    %17 = arith.truncf %16 : vector<256x256xf32> to vector<256x256xbf16>
    %c0_12 = arith.constant 0 : index
    %c0_13 = arith.constant 0 : index
    %18 = vector.load %arg6[%c0_12, %c0_13] : memref<256x128xbf16, #tpu.memory_space<vmem>>, vector<256x128xbf16>
    %cst_14 = arith.constant dense<0.000000e+00> : vector<256x128xf32>
    %19 = tpu.matmul %17, %18, %cst_14 {dimension_numbers = #tpu.dot_dimension_numbers<[1], [0], [0], [1], [0, 0, 1, 1], [], []>} : vector<256x256xbf16>, vector<256x128xbf16>, vector<256x128xf32> -> vector<256x128xf32>
    %c0_15 = arith.constant 0 : index
    %c0_16 = arith.constant 0 : index
    %20 = vector.load %arg7[%c0_15, %c0_16] : memref<1x128xf32, #tpu.memory_space<vmem>>, vector<1x128xf32>
    %21 = vector.broadcast %20 : vector<1x128xf32> to vector<256x128xf32>
    %22 = arith.addf %19, %21 : vector<256x128xf32>
    %c0_17 = arith.constant 0 : index
    %c0_18 = arith.constant 0 : index
    %23 = vector.load %arg8[%c0_17, %c0_18] : memref<256x128xf32, #tpu.memory_space<vmem>>, vector<256x128xf32>
    tpu.vector_store %arg8[%c0_17, %c0_18], %22 {strides = array<i32>} : memref<256x128xf32, #tpu.memory_space<vmem>>, vector<256x128xf32>,
    return
  }
  func.func @transform_0(%arg0: i32) -> (i32, i32) {
    %c0_i32 = arith.constant 0 : i32
    %c0_i32_0 = arith.constant 0 : i32
    return %arg0, %c0_i32 : i32, i32
  }
  func.func @transform_1(%arg0: i32) -> (i32, i32) {
    %c0_i32 = arith.constant 0 : i32
    %c0_i32_0 = arith.constant 0 : i32
    %c0_i32_1 = arith.constant 0 : i32
    return %c0_i32, %c0_i32_0 : i32, i32
  }
  func.func @transform_2(%arg0: i32) -> (i32, i32) {
    %c0_i32 = arith.constant 0 : i32
    %c0_i32_0 = arith.constant 0 : i32
    %c0_i32_1 = arith.constant 0 : i32
    return %c0_i32, %c0_i32_0 : i32, i32
  }
  func.func @transform_3(%arg0: i32) -> (i32, i32) {
    %c0_i32 = arith.constant 0 : i32
    %c0_i32_0 = arith.constant 0 : i32
    %c0_i32_1 = arith.constant 0 : i32
    return %c0_i32, %c0_i32_0 : i32, i32
  }
  func.func @transform_4(%arg0: i32) -> (i32, i32) {
    %c0_i32 = arith.constant 0 : i32
    %c0_i32_0 = arith.constant 0 : i32
    %c0_i32_1 = arith.constant 0 : i32
    return %c0_i32, %c0_i32_0 : i32, i32
  }
  func.func @transform_5(%arg0: i32) -> (i32, i32) {
    %c0_i32 = arith.constant 0 : i32
    %c0_i32_0 = arith.constant 0 : i32
    %c0_i32_1 = arith.constant 0 : i32
    return %c0_i32, %c0_i32_0 : i32, i32
  }
  func.func @transform_6(%arg0: i32) -> (i32, i32) {
    %c0_i32 = arith.constant 0 : i32
    %c0_i32_0 = arith.constant 0 : i32
    %c0_i32_1 = arith.constant 0 : i32
    return %c0_i32, %c0_i32_0 : i32, i32
  }
  func.func @transform_7(%arg0: i32) -> (i32, i32) {
    %c0_i32 = arith.constant 0 : i32
    %c0_i32_0 = arith.constant 0 : i32
    return %arg0, %c0_i32 : i32, i32
  }
}

module attributes {stable_mosaic.version = 11 : i64} {
  func.func @dynamics_mlp_kernel(%arg0: i32, %arg1: memref<256x16xf32, #tpu.memory_space<vmem>>, %arg2: memref<16x256xbf16, #tpu.memory_space<vmem>>, %arg3: memref<1x256xf32, #tpu.memory_space<vmem>>, %arg4: memref<256x256xbf16, #tpu.memory_space<vmem>>, %arg5: memref<1x256xf32, #tpu.memory_space<vmem>>, %arg6: memref<256x128xbf16, #tpu.memory_space<vmem>>, %arg7: memref<1x128xf32, #tpu.memory_space<vmem>>, %arg8: memref<256x128xf32, #tpu.memory_space<vmem>>) attributes {dimension_semantics = [#tpu.dimension_semantics<parallel>], iteration_bounds = array<i64: 1>, scalar_prefetch = 0 : i64, scratch_operands = 0 : i64, tpu.core_type = #tpu.core_type<tc>, window_params = [{transform_indices = @transform_0, window_bounds = array<i64: 256, 16>}, {pipeline_mode = #tpu.pipeline_mode<synchronous>, transform_indices = @transform_1, window_bounds = array<i64: 16, 256>}, {pipeline_mode = #tpu.pipeline_mode<synchronous>, transform_indices = @transform_2, window_bounds = array<i64: 1, 256>}, {pipeline_mode = #tpu.pipeline_mode<synchronous>, transform_indices = @transform_3, window_bounds = array<i64: 256, 256>}, {pipeline_mode = #tpu.pipeline_mode<synchronous>, transform_indices = @transform_4, window_bounds = array<i64: 1, 256>}, {pipeline_mode = #tpu.pipeline_mode<synchronous>, transform_indices = @transform_5, window_bounds = array<i64: 256, 128>}, {pipeline_mode = #tpu.pipeline_mode<synchronous>, transform_indices = @transform_6, window_bounds = array<i64: 1, 128>}, {transform_indices = @transform_7, window_bounds = array<i64: 256, 128>}]} {
    %c0 = arith.constant 0 : index
    %c0_0 = arith.constant 0 : index
    %0 = vector.load %arg1[%c0, %c0_0] : memref<256x16xf32, #tpu.memory_space<vmem>>, vector<256x16xf32>
    %1 = arith.truncf %0 : vector<256x16xf32> to vector<256x16xbf16>
    %c0_1 = arith.constant 0 : index
    %c0_2 = arith.constant 0 : index
    %2 = vector.load %arg2[%c0_1, %c0_2] : memref<16x256xbf16, #tpu.memory_space<vmem>>, vector<16x256xbf16>
    %cst = arith.constant dense<0.000000e+00> : vector<256x256xf32>
    %3 = tpu.matmul %1, %2, %cst {dimension_numbers = #tpu.dot_dimension_numbers<[1], [0], [0], [1], [0, 0, 1, 1], [], []>} : vector<256x16xbf16>, vector<16x256xbf16>, vector<256x256xf32> -> vector<256x256xf32>
    %c0_3 = arith.constant 0 : index
    %c0_4 = arith.constant 0 : index
    %4 = vector.load %arg3[%c0_3, %c0_4] : memref<1x256xf32, #tpu.memory_space<vmem>>, vector<1x256xf32>
    %5 = vector.broadcast %4 : vector<1x256xf32> to vector<256x256xf32>
    %6 = arith.addf %3, %5 : vector<256x256xf32>
    %cst_5 = arith.constant 0.000000e+00 : f32
    %7 = vector.broadcast %cst_5 : f32 to vector<256x256xf32>
    %8 = arith.maximumf %6, %7 : vector<256x256xf32>
    %9 = arith.truncf %8 : vector<256x256xf32> to vector<256x256xbf16>
    %c0_6 = arith.constant 0 : index
    %c0_7 = arith.constant 0 : index
    %10 = vector.load %arg4[%c0_6, %c0_7] : memref<256x256xbf16, #tpu.memory_space<vmem>>, vector<256x256xbf16>
    %cst_8 = arith.constant dense<0.000000e+00> : vector<256x256xf32>
    %11 = tpu.matmul %9, %10, %cst_8 {dimension_numbers = #tpu.dot_dimension_numbers<[1], [0], [0], [1], [0, 0, 1, 1], [], []>} : vector<256x256xbf16>, vector<256x256xbf16>, vector<256x256xf32> -> vector<256x256xf32>
    %c0_9 = arith.constant 0 : index
    %c0_10 = arith.constant 0 : index
    %12 = vector.load %arg5[%c0_9, %c0_10] : memref<1x256xf32, #tpu.memory_space<vmem>>, vector<1x256xf32>
    %13 = vector.broadcast %12 : vector<1x256xf32> to vector<256x256xf32>
    %14 = arith.addf %11, %13 : vector<256x256xf32>
    %cst_11 = arith.constant 0.000000e+00 : f32
    %15 = vector.broadcast %cst_11 : f32 to vector<256x256xf32>
    %16 = arith.maximumf %14, %15 : vector<256x256xf32>
    %17 = arith.truncf %16 : vector<256x256xf32> to vector<256x256xbf16>
    %c0_12 = arith.constant 0 : index
    %c0_13 = arith.constant 0 : index
    %18 = vector.load %arg6[%c0_12, %c0_13] : memref<256x128xbf16, #tpu.memory_space<vmem>>, vector<256x128xbf16>
    %cst_14 = arith.constant dense<0.000000e+00> : vector<256x128xf32>
    %19 = tpu.matmul %17, %18, %cst_14 {dimension_numbers = #tpu.dot_dimension_numbers<[1], [0], [0], [1], [0, 0, 1, 1], [], []>} : vector<256x256xbf16>, vector<256x128xbf16>, vector<256x128xf32> -> vector<256x128xf32>
    %c0_15 = arith.constant 0 : index
    %c0_16 = arith.constant 0 : index
    %20 = vector.load %arg7[%c0_15, %c0_16] : memref<1x128xf32, #tpu.memory_space<vmem>>, vector<1x128xf32>
    %21 = vector.broadcast %20 : vector<1x128xf32> to vector<256x128xf32>
    %22 = arith.addf %19, %21 : vector<256x128xf32>
    %c0_17 = arith.constant 0 : index
    %c0_18 = arith.constant 0 : index
    %23 = vector.load %arg8[%c0_17, %c0_18] : memref<256x128xf32, #tpu.memory_space<vmem>>, vector<256x128xf32>
    tpu.vector_store %arg8[%c0_17, %c0_18], %22 {strides = array<i32>} : memref<256x128xf32, #tpu.memory_space<vmem>>, vector<256x128xf32>,
    return
  }
  func.func @transform_0(%arg0: i32) -> (i32, i32) {
    %c0_i32 = arith.constant 0 : i32
    %c0_i32_0 = arith.constant 0 : i32
    return %arg0, %c0_i32 : i32, i32
  }
  func.func @transform_1(%arg0: i32) -> (i32, i32) {
    %c0_i32 = arith.constant 0 : i32
    %c0_i32_0 = arith.constant 0 : i32
    %c0_i32_1 = arith.constant 0 : i32
    return %c0_i32, %c0_i32_0 : i32, i32
  }
  func.func @transform_2(%arg0: i32) -> (i32, i32) {
    %c0_i32 = arith.constant 0 : i32
    %c0_i32_0 = arith.constant 0 : i32
    %c0_i32_1 = arith.constant 0 : i32
    return %c0_i32, %c0_i32_0 : i32, i32
  }
  func.func @transform_3(%arg0: i32) -> (i32, i32) {
    %c0_i32 = arith.constant 0 : i32
    %c0_i32_0 = arith.constant 0 : i32
    %c0_i32_1 = arith.constant 0 : i32
    return %c0_i32, %c0_i32_0 : i32, i32
  }
  func.func @transform_4(%arg0: i32) -> (i32, i32) {
    %c0_i32 = arith.constant 0 : i32
    %c0_i32_0 = arith.constant 0 : i32
    %c0_i32_1 = arith.constant 0 : i32
    return %c0_i32, %c0_i32_0 : i32, i32
  }
  func.func @transform_5(%arg0: i32) -> (i32, i32) {
    %c0_i32 = arith.constant 0 : i32
    %c0_i32_0 = arith.constant 0 : i32
    %c0_i32_1 = arith.constant 0 : i32
    return %c0_i32, %c0_i32_0 : i32, i32
  }
  func.func @transform_6(%arg0: i32) -> (i32, i32) {
    %c0_i32 = arith.constant 0 : i32
    %c0_i32_0 = arith.constant 0 : i32
    %c0_i32_1 = arith.constant 0 : i32
    return %c0_i32, %c0_i32_0 : i32, i32
  }
  func.func @transform_7(%arg0: i32) -> (i32, i32) {
    %c0_i32 = arith.constant 0 : i32
    %c0_i32_0 = arith.constant 0 : i32
    return %arg0, %c0_i32 : i32, i32
  }
}

</mosaic_0001>

<llo_original>
// kernel: tpu_custom_call.1
$region0: #{tpu_custom_call.1}
  #allocation0 [shape = 'u32[]', space=smem, size = 0x4, offset = 0x4, fixed_abs, tag = 'smem constant byte address 0x4 - core index']
  #allocation1 [shape = 'u32[144,128]{1,0:T(1,128)}', space=vmem, size = 0x12000, scoped, tag = 'internal scratch']
  %s0 = inlined_call_operand.vmem [shape: f32[256,16], index: 0, kind: input, shape index: {}]
  %s1 = inlined_call_operand.vmem [shape: bf16[16,256], index: 1, kind: input, shape index: {}]
  %s2 = inlined_call_operand.vmem [shape: f32[1,256], index: 2, kind: input, shape index: {}]
  %s3 = inlined_call_operand.vmem [shape: bf16[256,256], index: 3, kind: input, shape index: {}]
  %s4 = inlined_call_operand.vmem [shape: f32[1,256], index: 4, kind: input, shape index: {}]
  %s5 = inlined_call_operand.hbm [shape: bf16[256,128], index: 5, kind: input, shape index: {}]
  %s6 = inlined_call_operand.vmem [shape: f32[1,128], index: 6, kind: input, shape index: {}]
  %s7 = inlined_call_operand.hbm [shape: f32[256,128], index: 7, kind: output, shape index: {}]
  %s8 = sld [smem:[#allocation0]]
  $region42: #{tpu_custom_call.1} parent=0
    _
  %s10 = ssub.s32 1, %s8
  %s11 = scalar_select 0, %s10, %s8
  $region1: #{tpu_custom_call.1} parent=0
    #allocation2 [shape = 'u8[65536]{0}', space=vmem, size = 0x10000, scoped, tag = 'input window, operand 5, single buffered']
    #allocation3 [shape = 's32[1]{0}', space=sflag, size = 0x4, scoped, tag = 'scoped memory for tpu_custom_call.1']
    #allocation4 [shape = 's32[1]{0}', space=sflag, size = 0x4, scoped, tag = 'scoped memory for tpu_custom_call.1']
    #allocation5 [shape = 'u8[131072]{0}', space=vmem, size = 0x20000, scoped, tag = 'output window, operand 0, single buffered']
    %12 = vsyncpa [#allocation3], 0
    %13 = vsyncpa [#allocation4], 0
    // Predicated region
    $region2: #{tpu_custom_call.1} parent=1 // pred_check
      _
    $region3: #{tpu_custom_call.1} parent=1 // pred_check_branch
      %15 = sbr.rel (0) target = $region5
    $region4: #{tpu_custom_call.1} parent=1 // pred_region
      _
    $region5: #{tpu_custom_call.1} parent=1 // pred_fallthru
      _
    // Predicated region
    $region6: #{tpu_custom_call.1} parent=1 // pred_check
      _
    $region7: #{tpu_custom_call.1} parent=1 // pred_check_branch
      %17 = sbr.rel (0) target = $region9
    $region8: #{tpu_custom_call.1} parent=1 // pred_region
      _
    $region9: #{tpu_custom_call.1} parent=1 // pred_fallthru
      _
    // Predicated region
    $region10: #{tpu_custom_call.1} parent=1 // pred_check
      _
    $region11: #{tpu_custom_call.1} parent=1 // pred_check_branch
      %19 = sbr.rel (0) target = $region13
    $region12: #{tpu_custom_call.1} parent=1 // pred_region
      _
    $region13: #{tpu_custom_call.1} parent=1 // pred_fallthru
      _
    // Predicated region
    $region14: #{tpu_custom_call.1} parent=1 // pred_check
      _
    $region15: #{tpu_custom_call.1} parent=1 // pred_check_branch
      %21 = sbr.rel (0) target = $region17
    $region16: #{tpu_custom_call.1} parent=1 // pred_region
      _
    $region17: #{tpu_custom_call.1} parent=1 // pred_fallthru
      _
    // Predicated region
    $region18: #{tpu_custom_call.1} parent=1 // pred_check
      _
    $region19: #{tpu_custom_call.1} parent=1 // pred_check_branch
      %23 = sbr.rel (0) target = $region21
    $region20: #{tpu_custom_call.1} parent=1 // pred_region
      _
    $region21: #{tpu_custom_call.1} parent=1 // pred_fallthru
      _
    // Predicated region
    $region22: #{tpu_custom_call.1} parent=1 // pred_check
      _
    $region23: #{tpu_custom_call.1} parent=1 // pred_check_branch
      %25 = sbr.rel (0) target = $region25
    $region24: #{tpu_custom_call.1} parent=1 // pred_region
      %s27 = ssub.s32 2048, 2048
      %28 = vsyncadd [#allocation3], %s27
      %s29 = sshll.u32 [#allocation2], 4
      %s30 = int_to_ptr.vmem [resolvable:$true] %s29
      %35 = dma.hbm_to_vmem [thread:$0]  %s5, 2048, %s30, [#allocation3], 64, 64, 4
    $region25: #{tpu_custom_call.1} parent=1 // pred_fallthru
      _
    // Predicated region
    $region26: #{tpu_custom_call.1} parent=1 // pred_check
      _
    $region27: #{tpu_custom_call.1} parent=1 // pred_check_branch
      %37 = sbr.rel (0) target = $region29
    $region28: #{tpu_custom_call.1} parent=1 // pred_region
      _
    $region29: #{tpu_custom_call.1} parent=1 // pred_fallthru
      _
    // Predicated region
    $region30: #{tpu_custom_call.1} parent=1 // pred_check
      _
    $region31: #{tpu_custom_call.1} parent=1 // pred_check_branch
      %39 = sbr.rel (0) target = $region33
    $region32: #{tpu_custom_call.1} parent=1 // pred_region
      %40 = dma.done [#allocation3], 2048
    $region33: #{tpu_custom_call.1} parent=1 // pred_fallthru
      _
    %v42 = vld [vmem:[%s0] sm:$0xff]
    %v43 = vld [vmem:[%s0 + $0x8] sm:$0xff]
    %v44 = vld [vmem:[%s0 + $0x10] sm:$0xff]
    %v45 = vld [vmem:[%s0 + $0x18] sm:$0xff]
    %v46 = vld [vmem:[%s0 + $0x20] sm:$0xff]
    %v47 = vld [vmem:[%s0 + $0x28] sm:$0xff]
    %v48 = vld [vmem:[%s0 + $0x30] sm:$0xff]
    %v49 = vld [vmem:[%s0 + $0x38] sm:$0xff]
    %v50 = vld [vmem:[%s0 + $0x40] sm:$0xff]
    %v51 = vld [vmem:[%s0 + $0x48] sm:$0xff]
    %v52 = vld [vmem:[%s0 + $0x50] sm:$0xff]
    %v53 = vld [vmem:[%s0 + $0x58] sm:$0xff]
    %v54 = vld [vmem:[%s0 + $0x60] sm:$0xff]
    %v55 = vld [vmem:[%s0 + $0x68] sm:$0xff]
    %v56 = vld [vmem:[%s0 + $0x70] sm:$0xff]
    %v57 = vld [vmem:[%s0 + $0x78] sm:$0xff]
    %v58 = vld [vmem:[%s0 + $0x80] sm:$0xff]
    %v59 = vld [vmem:[%s0 + $0x88] sm:$0xff]
    %v60 = vld [vmem:[%s0 + $0x90] sm:$0xff]
    %v61 = vld [vmem:[%s0 + $0x98] sm:$0xff]
    %v62 = vld [vmem:[%s0 + $0xa0] sm:$0xff]
    %v63 = vld [vmem:[%s0 + $0xa8] sm:$0xff]
    %v64 = vld [vmem:[%s0 + $0xb0] sm:$0xff]
    %v65 = vld [vmem:[%s0 + $0xb8] sm:$0xff]
    %v66 = vld [vmem:[%s0 + $0xc0] sm:$0xff]
    %v67 = vld [vmem:[%s0 + $0xc8] sm:$0xff]
    %v68 = vld [vmem:[%s0 + $0xd0] sm:$0xff]
    %v69 = vld [vmem:[%s0 + $0xd8] sm:$0xff]
    %v70 = vld [vmem:[%s0 + $0xe0] sm:$0xff]
    %v71 = vld [vmem:[%s0 + $0xe8] sm:$0xff]
    %v72 = vld [vmem:[%s0 + $0xf0] sm:$0xff]
    %v73 = vld [vmem:[%s0 + $0xf8] sm:$0xff]
    %v74 = vpack.c.bf16 %v43, %v42
    %v75 = vpack.c.bf16 %v45, %v44
    %v76 = vpack.c.bf16 %v47, %v46
    %v77 = vpack.c.bf16 %v49, %v48
    %v78 = vpack.c.bf16 %v51, %v50
    %v79 = vpack.c.bf16 %v53, %v52
    %v80 = vpack.c.bf16 %v55, %v54
    %v81 = vpack.c.bf16 %v57, %v56
    %v82 = vpack.c.bf16 %v59, %v58
    %v83 = vpack.c.bf16 %v61, %v60
    %v84 = vpack.c.bf16 %v63, %v62
    %v85 = vpack.c.bf16 %v65, %v64
    %v86 = vpack.c.bf16 %v67, %v66
    %v87 = vpack.c.bf16 %v69, %v68
    %v88 = vpack.c.bf16 %v71, %v70
    %v89 = vpack.c.bf16 %v73, %v72
    %v90 = vld [vmem:[%s1] sm:$0xff]
    %v91 = vld [vmem:[%s1 + $0x8] sm:$0xff]
    %v92 = vld [vmem:[%s2] sm:$0x3]
    %v94 = vlaneseq
    %v95 = vshrl.u32 %v94, 7
    %v96 = vsub.s32 0, %v95
    %v97 = vrot.slane %v92, %v96
    %v98 = vlaneseq
    %v99 = vshrl.u32 %v98, 7
    %v100 = vsub.s32 1, %v99
    %v101 = vrot.slane %v92, %v100
    %v106 = vunpack.c.l.b16 %v90
    %v107 = vunpack.c.h.b16 %v90
    %v108 = vunpack.c.l.b16 %v91
    %v109 = vunpack.c.h.b16 %v91
    %v110 = vpack.c.b16 %v108, %v106
    %v111 = vpack.c.b16 %v109, %v107
    %vm114 = vcmask 130048
    %v116 = vsel %vm114, %v74, 0
    %v119 = vsel %vm114, %v75, 0
    %v122 = vsel %vm114, %v76, 0
    %v125 = vsel %vm114, %v77, 0
    %v128 = vsel %vm114, %v78, 0
    %v131 = vsel %vm114, %v79, 0
    %v134 = vsel %vm114, %v80, 0
    %v137 = vsel %vm114, %v81, 0
    %v140 = vsel %vm114, %v82, 0
    %v143 = vsel %vm114, %v83, 0
    %v146 = vsel %vm114, %v84, 0
    %v149 = vsel %vm114, %v85, 0
    %v152 = vsel %vm114, %v86, 0
    %v155 = vsel %vm114, %v87, 0
    %v158 = vsel %vm114, %v88, 0
    %v161 = vsel %vm114, %v89, 0
    %163 = vmatprep.subr.bf16.mxu0 %v111
    %164 = vmatpush1.bf16.msra.mxu0 %v110
    %165 = vmatprep.subr.bf16.mxu0 0
    %166 = vmatpush1.bf16.msra.mxu0 0
    %167 = vmatprep.subr.bf16.mxu0 0
    %168 = vmatpush1.bf16.msra.mxu0 0
    %169 = vmatprep.subr.bf16.mxu0 0
    %170 = vmatpush1.bf16.msra.mxu0 0
    %171 = vmatprep.subr.bf16.mxu0 0
    %172 = vmatpush1.bf16.msra.mxu0 0
    %173 = vmatprep.subr.bf16.mxu0 0
    %174 = vmatpush1.bf16.msra.mxu0 0
    %175 = vmatprep.subr.bf16.mxu0 0
    %176 = vmatpush1.bf16.msra.mxu0 0
    %177 = vmatprep.subr.bf16.mxu0 0
    %178 = vmatpush1.bf16.msra.mxu0 0
    %179 = vmatprep.subr.bf16.mxu0 0
    %180 = vmatpush1.bf16.msra.mxu0 0
    %181 = vmatprep.subr.bf16.mxu0 0
    %182 = vmatpush1.bf16.msra.mxu0 0
    %183 = vmatprep.subr.bf16.mxu0 0
    %184 = vmatpush1.bf16.msra.mxu0 0
    %185 = vmatprep.subr.bf16.mxu0 0
    %186 = vmatpush1.bf16.msra.mxu0 0
    %187 = vmatprep.subr.bf16.mxu0 0
    %188 = vmatpush1.bf16.msra.mxu0 0
    %189 = vmatprep.subr.bf16.mxu0 0
    %190 = vmatpush1.bf16.msra.mxu0 0
    %191 = vmatprep.subr.bf16.mxu0 0
    %192 = vmatpush1.bf16.msra.mxu0 0
    %193 = vmatprep.subr.bf16.mxu0 0
    %194 = vmatpush1.bf16.msra.mxu0 0
    %195 = vmatprep.mubr.bf16.mxu0 0
    %196 = vmatmul.mubr.bf16.gmra.mrb[0].mxu0 %v116
    %v197 = vpop.f32.mrb[0].mxu0
    %v198 = vadd.f32 %v97, %v197
    %v199 = vpop.f32.mrb[0].mxu0
    %v200 = vadd.f32 %v101, %v199
    %v201 = vpop.f32.mrb[0].mxu0
    %v202 = vadd.f32 %v97, %v201
    %v203 = vpop.f32.mrb[0].mxu0
    %v204 = vadd.f32 %v101, %v203
    %205 = vmatprep.mubr.bf16.mxu0 0
    %206 = vmatmul.mubr.bf16.gmra.mrb[0].mxu0 %v119
    %v207 = vpop.f32.mrb[0].mxu0
    %v208 = vadd.f32 %v97, %v207
    %v209 = vpop.f32.mrb[0].mxu0
    %v210 = vadd.f32 %v101, %v209
    %v211 = vpop.f32.mrb[0].mxu0
    %v212 = vadd.f32 %v97, %v211
    %v213 = vpop.f32.mrb[0].mxu0
    %v214 = vadd.f32 %v101, %v213
    %215 = vmatprep.mubr.bf16.mxu0 0
    %216 = vmatmul.mubr.bf16.gmra.mrb[0].mxu0 %v122
    %v217 = vpop.f32.mrb[0].mxu0
    %v218 = vadd.f32 %v97, %v217
    %v219 = vpop.f32.mrb[0].mxu0
    %v220 = vadd.f32 %v101, %v219
    %v221 = vpop.f32.mrb[0].mxu0
    %v222 = vadd.f32 %v97, %v221
    %v223 = vpop.f32.mrb[0].mxu0
    %v224 = vadd.f32 %v101, %v223
    %225 = vmatprep.mubr.bf16.mxu0 0
    %226 = vmatmul.mubr.bf16.gmra.mrb[0].mxu0 %v125
    %v227 = vpop.f32.mrb[0].mxu0
    %v228 = vadd.f32 %v97, %v227
    %v229 = vpop.f32.mrb[0].mxu0
    %v230 = vadd.f32 %v101, %v229
    %v231 = vpop.f32.mrb[0].mxu0
    %v232 = vadd.f32 %v97, %v231
    %v233 = vpop.f32.mrb[0].mxu0
    %v234 = vadd.f32 %v101, %v233
    %235 = vmatprep.mubr.bf16.mxu0 0
    %236 = vmatmul.mubr.bf16.gmra.mrb[0].mxu0 %v128
    %v237 = vpop.f32.mrb[0].mxu0
    %v238 = vadd.f32 %v97, %v237
    %v239 = vpop.f32.mrb[0].mxu0
    %v240 = vadd.f32 %v101, %v239
    %v241 = vpop.f32.mrb[0].mxu0
    %v242 = vadd.f32 %v97, %v241
    %v243 = vpop.f32.mrb[0].mxu0
    %v244 = vadd.f32 %v101, %v243
    %245 = vmatprep.mubr.bf16.mxu0 0
    %246 = vmatmul.mubr.bf16.gmra.mrb[0].mxu0 %v131
    %v247 = vpop.f32.mrb[0].mxu0
    %v248 = vadd.f32 %v97, %v247
    %v249 = vpop.f32.mrb[0].mxu0
    %v250 = vadd.f32 %v101, %v249
    %v251 = vpop.f32.mrb[0].mxu0
    %v252 = vadd.f32 %v97, %v251
    %v253 = vpop.f32.mrb[0].mxu0
    %v254 = vadd.f32 %v101, %v253
    %255 = vmatprep.mubr.bf16.mxu0 0
    %256 = vmatmul.mubr.bf16.gmra.mrb[0].mxu0 %v134
    %v257 = vpop.f32.mrb[0].mxu0
    %v258 = vadd.f32 %v97, %v257
    %v259 = vpop.f32.mrb[0].mxu0
    %v260 = vadd.f32 %v101, %v259
    %v261 = vpop.f32.mrb[0].mxu0
    %v262 = vadd.f32 %v97, %v261
    %v263 = vpop.f32.mrb[0].mxu0
    %v264 = vadd.f32 %v101, %v263
    %265 = vmatprep.mubr.bf16.mxu0 0
    %266 = vmatmul.mubr.bf16.gmra.mrb[0].mxu0 %v137
    %v267 = vpop.f32.mrb[0].mxu0
    %v268 = vadd.f32 %v97, %v267
    %v269 = vpop.f32.mrb[0].mxu0
    %v270 = vadd.f32 %v101, %v269
    %v271 = vpop.f32.mrb[0].mxu0
    %v272 = vadd.f32 %v97, %v271
    %v273 = vpop.f32.mrb[0].mxu0
    %v274 = vadd.f32 %v101, %v273
    %275 = vmatprep.mubr.bf16.mxu0 0
    %276 = vmatmul.mubr.bf16.gmra.mrb[0].mxu0 %v140
    %v277 = vpop.f32.mrb[0].mxu0
    %v278 = vadd.f32 %v97, %v277
    %v279 = vpop.f32.mrb[0].mxu0
    %v280 = vadd.f32 %v101, %v279
    %v281 = vpop.f32.mrb[0].mxu0
    %v282 = vadd.f32 %v97, %v281
    %v283 = vpop.f32.mrb[0].mxu0
    %v284 = vadd.f32 %v101, %v283
    %285 = vmatprep.mubr.bf16.mxu0 0
    %286 = vmatmul.mubr.bf16.gmra.mrb[0].mxu0 %v143
    %v287 = vpop.f32.mrb[0].mxu0
    %v288 = vadd.f32 %v97, %v287
    %v289 = vpop.f32.mrb[0].mxu0
    %v290 = vadd.f32 %v101, %v289
    %v291 = vpop.f32.mrb[0].mxu0
    %v292 = vadd.f32 %v97, %v291
    %v293 = vpop.f32.mrb[0].mxu0
    %v294 = vadd.f32 %v101, %v293
    %295 = vmatprep.mubr.bf16.mxu0 0
    %296 = vmatmul.mubr.bf16.gmra.mrb[0].mxu0 %v146
    %v297 = vpop.f32.mrb[0].mxu0
    %v298 = vadd.f32 %v97, %v297
    %v299 = vpop.f32.mrb[0].mxu0
    %v300 = vadd.f32 %v101, %v299
    %v301 = vpop.f32.mrb[0].mxu0
    %v302 = vadd.f32 %v97, %v301
    %v303 = vpop.f32.mrb[0].mxu0
    %v304 = vadd.f32 %v101, %v303
    %305 = vmatprep.mubr.bf16.mxu0 0
    %306 = vmatmul.mubr.bf16.gmra.mrb[0].mxu0 %v149
    %v307 = vpop.f32.mrb[0].mxu0
    %v308 = vadd.f32 %v97, %v307
    %v309 = vpop.f32.mrb[0].mxu0
    %v310 = vadd.f32 %v101, %v309
    %v311 = vpop.f32.mrb[0].mxu0
    %v312 = vadd.f32 %v97, %v311
    %v313 = vpop.f32.mrb[0].mxu0
    %v314 = vadd.f32 %v101, %v313
    %315 = vmatprep.mubr.bf16.mxu0 0
    %316 = vmatmul.mubr.bf16.gmra.mrb[0].mxu0 %v152
    %v317 = vpop.f32.mrb[0].mxu0
    %v318 = vadd.f32 %v97, %v317
    %v319 = vpop.f32.mrb[0].mxu0
    %v320 = vadd.f32 %v101, %v319
    %v321 = vpop.f32.mrb[0].mxu0
    %v322 = vadd.f32 %v97, %v321
    %v323 = vpop.f32.mrb[0].mxu0
    %v324 = vadd.f32 %v101, %v323
    %325 = vmatprep.mubr.bf16.mxu0 0
    %326 = vmatmul.mubr.bf16.gmra.mrb[0].mxu0 %v155
    %v327 = vpop.f32.mrb[0].mxu0
    %v328 = vadd.f32 %v97, %v327
    %v329 = vpop.f32.mrb[0].mxu0
    %v330 = vadd.f32 %v101, %v329
    %v331 = vpop.f32.mrb[0].mxu0
    %v332 = vadd.f32 %v97, %v331
    %v333 = vpop.f32.mrb[0].mxu0
    %v334 = vadd.f32 %v101, %v333
    %335 = vmatprep.mubr.bf16.mxu0 0
    %336 = vmatmul.mubr.bf16.gmra.mrb[0].mxu0 %v158
    %v337 = vpop.f32.mrb[0].mxu0
    %v338 = vadd.f32 %v97, %v337
    %v339 = vpop.f32.mrb[0].mxu0
    %v340 = vadd.f32 %v101, %v339
    %v341 = vpop.f32.mrb[0].mxu0
    %v342 = vadd.f32 %v97, %v341
    %v343 = vpop.f32.mrb[0].mxu0
    %v344 = vadd.f32 %v101, %v343
    %345 = vmatprep.mubr.bf16.mxu0 0
    %346 = vmatmul.mubr.bf16.gmra.mrb[0].mxu0 %v161
    %v347 = vpop.f32.mrb[0].mxu0
    %v348 = vadd.f32 %v97, %v347
    %v349 = vpop.f32.mrb[0].mxu0
    %v350 = vadd.f32 %v101, %v349
    %v351 = vpop.f32.mrb[0].mxu0
    %v352 = vadd.f32 %v97, %v351
    %v353 = vpop.f32.mrb[0].mxu0
    %v354 = vadd.f32 %v101, %v353
    %355 = vdwg.mxu0
    %v356 = vmax.f32 %v198, 0.0
    %v357 = vmax.f32 %v200, 0.0
    %v358 = vmax.f32 %v202, 0.0
    %v359 = vmax.f32 %v204, 0.0
    %v360 = vmax.f32 %v208, 0.0
    %v361 = vmax.f32 %v210, 0.0
    %v362 = vmax.f32 %v212, 0.0
    %v363 = vmax.f32 %v214, 0.0
    %v364 = vmax.f32 %v218, 0.0
    %v365 = vmax.f32 %v220, 0.0
    %v366 = vmax.f32 %v222, 0.0
    %v367 = vmax.f32 %v224, 0.0
    %v368 = vmax.f32 %v228, 0.0
    %v369 = vmax.f32 %v230, 0.0
    %v370 = vmax.f32 %v232, 0.0
    %v371 = vmax.f32 %v234, 0.0
    %v372 = vmax.f32 %v238, 0.0
    %v373 = vmax.f32 %v240, 0.0
    %v374 = vmax.f32 %v242, 0.0
    %v375 = vmax.f32 %v244, 0.0
    %v376 = vmax.f32 %v248, 0.0
    %v377 = vmax.f32 %v250, 0.0
    %v378 = vmax.f32 %v252, 0.0
    %v379 = vmax.f32 %v254, 0.0
    %v380 = vmax.f32 %v258, 0.0
    %v381 = vmax.f32 %v260, 0.0
    %v382 = vmax.f32 %v262, 0.0
    %v383 = vmax.f32 %v264, 0.0
    %v384 = vmax.f32 %v268, 0.0
    %v385 = vmax.f32 %v270, 0.0
    %v386 = vmax.f32 %v272, 0.0
    %v387 = vmax.f32 %v274, 0.0
    %v388 = vmax.f32 %v278, 0.0
    %v389 = vmax.f32 %v280, 0.0
    %v390 = vmax.f32 %v282, 0.0
    %v391 = vmax.f32 %v284, 0.0
    %v392 = vmax.f32 %v288, 0.0
    %v393 = vmax.f32 %v290, 0.0
    %v394 = vmax.f32 %v292, 0.0
    %v395 = vmax.f32 %v294, 0.0
    %v396 = vmax.f32 %v298, 0.0
    %v397 = vmax.f32 %v300, 0.0
    %v398 = vmax.f32 %v302, 0.0
    %v399 = vmax.f32 %v304, 0.0
    %v400 = vmax.f32 %v308, 0.0
    %v401 = vmax.f32 %v310, 0.0
    %v402 = vmax.f32 %v312, 0.0
    %v403 = vmax.f32 %v314, 0.0
    %v404 = vmax.f32 %v318, 0.0
    %v405 = vmax.f32 %v320, 0.0
    %v406 = vmax.f32 %v322, 0.0
    %v407 = vmax.f32 %v324, 0.0
    %v408 = vmax.f32 %v328, 0.0
    %v409 = vmax.f32 %v330, 0.0
    %v410 = vmax.f32 %v332, 0.0
    %v411 = vmax.f32 %v334, 0.0
    %v412 = vmax.f32 %v338, 0.0
    %v413 = vmax.f32 %v340, 0.0
    %v414 = vmax.f32 %v342, 0.0
    %v415 = vmax.f32 %v344, 0.0
    %v416 = vmax.f32 %v348, 0.0
    %v417 = vmax.f32 %v350, 0.0
    %v418 = vmax.f32 %v352, 0.0
    %v419 = vmax.f32 %v354, 0.0
    %v420 = vpack.c.bf16 %v358, %v356
    %v421 = vpack.c.bf16 %v359, %v357
    %v422 = vpack.c.bf16 %v362, %v360
    %v423 = vpack.c.bf16 %v363, %v361
    %v424 = vpack.c.bf16 %v366, %v364
    %v425 = vpack.c.bf16 %v367, %v365
    %v426 = vpack.c.bf16 %v370, %v368
    %v427 = vpack.c.bf16 %v371, %v369
    %v428 = vpack.c.bf16 %v374, %v372
    %v429 = vpack.c.bf16 %v375, %v373
    %v430 = vpack.c.bf16 %v378, %v376
    %v431 = vpack.c.bf16 %v379, %v377
    %v432 = vpack.c.bf16 %v382, %v380
    %v433 = vpack.c.bf16 %v383, %v381
    %v434 = vpack.c.bf16 %v386, %v384
    %v435 = vpack.c.bf16 %v387, %v385
    %v436 = vpack.c.bf16 %v390, %v388
    %v437 = vpack.c.bf16 %v391, %v389
    %v438 = vpack.c.bf16 %v394, %v392
    %v439 = vpack.c.bf16 %v395, %v393
    %v440 = vpack.c.bf16 %v398, %v396
    %v441 = vpack.c.bf16 %v399, %v397
    %v442 = vpack.c.bf16 %v402, %v400
    %v443 = vpack.c.bf16 %v403, %v401
    %v444 = vpack.c.bf16 %v406, %v404
    %v445 = vpack.c.bf16 %v407, %v405
    %v446 = vpack.c.bf16 %v410, %v408
    %v447 = vpack.c.bf16 %v411, %v409
    %v448 = vpack.c.bf16 %v414, %v412
    %v449 = vpack.c.bf16 %v415, %v413
    %v450 = vpack.c.bf16 %v418, %v416
    %v451 = vpack.c.bf16 %v419, %v417
    %v452 = vld [vmem:[%s3] sm:$0xff]
    %v453 = vld [vmem:[%s3 + $0x8] sm:$0xff]
    %v454 = vld [vmem:[%s3 + $0x10] sm:$0xff]
    %v455 = vld [vmem:[%s3 + $0x18] sm:$0xff]
    %v456 = vld [vmem:[%s3 + $0x20] sm:$0xff]
    %v457 = vld [vmem:[%s3 + $0x28] sm:$0xff]
    %v458 = vld [vmem:[%s3 + $0x30] sm:$0xff]
    %v459 = vld [vmem:[%s3 + $0x38] sm:$0xff]
    %v460 = vld [vmem:[%s3 + $0x40] sm:$0xff]
    %v461 = vld [vmem:[%s3 + $0x48] sm:$0xff]
    %v462 = vld [vmem:[%s3 + $0x50] sm:$0xff]
    %v463 = vld [vmem:[%s3 + $0x58] sm:$0xff]
    %v464 = vld [vmem:[%s3 + $0x60] sm:$0xff]
    %v465 = vld [vmem:[%s3 + $0x68] sm:$0xff]
    %v466 = vld [vmem:[%s3 + $0x70] sm:$0xff]
    %v467 = vld [vmem:[%s3 + $0x78] sm:$0xff]
    %v468 = vld [vmem:[%s3 + $0x80] sm:$0xff]
    %v469 = vld [vmem:[%s3 + $0x88] sm:$0xff]
    %v470 = vld [vmem:[%s3 + $0x90] sm:$0xff]
    %v471 = vld [vmem:[%s3 + $0x98] sm:$0xff]
    %v472 = vld [vmem:[%s3 + $0xa0] sm:$0xff]
    %v473 = vld [vmem:[%s3 + $0xa8] sm:$0xff]
    %v474 = vld [vmem:[%s3 + $0xb0] sm:$0xff]
    %v475 = vld [vmem:[%s3 + $0xb8] sm:$0xff]
    %v476 = vld [vmem:[%s3 + $0xc0] sm:$0xff]
    %v477 = vld [vmem:[%s3 + $0xc8] sm:$0xff]
    %v478 = vld [vmem:[%s3 + $0xd0] sm:$0xff]
    %v479 = vld [vmem:[%s3 + $0xd8] sm:$0xff]
    %v480 = vld [vmem:[%s3 + $0xe0] sm:$0xff]
    %v481 = vld [vmem:[%s3 + $0xe8] sm:$0xff]
    %v482 = vld [vmem:[%s3 + $0xf0] sm:$0xff]
    %v483 = vld [vmem:[%s3 + $0xf8] sm:$0xff]
    %v484 = vld [vmem:[%s4] sm:$0x3]
    %v486 = vlaneseq
    %v487 = vshrl.u32 %v486, 7
    %v488 = vsub.s32 0, %v487
    %v489 = vrot.slane %v484, %v488
    %v490 = vlaneseq
    %v491 = vshrl.u32 %v490, 7
    %v492 = vsub.s32 1, %v491
    %v493 = vrot.slane %v484, %v492
    %v528 = vunpack.c.l.b16 %v452
    %v529 = vunpack.c.h.b16 %v452
    %v530 = vunpack.c.l.b16 %v453
    %v531 = vunpack.c.h.b16 %v453
    %v532 = vunpack.c.l.b16 %v454
    %v533 = vunpack.c.h.b16 %v454
    %v534 = vunpack.c.l.b16 %v455
    %v535 = vunpack.c.h.b16 %v455
    %v536 = vunpack.c.l.b16 %v456
    %v537 = vunpack.c.h.b16 %v456
    %v538 = vunpack.c.l.b16 %v457
    %v539 = vunpack.c.h.b16 %v457
    %v540 = vunpack.c.l.b16 %v458
    %v541 = vunpack.c.h.b16 %v458
    %v542 = vunpack.c.l.b16 %v459
    %v543 = vunpack.c.h.b16 %v459
    %v544 = vunpack.c.l.b16 %v460
    %v545 = vunpack.c.h.b16 %v460
    %v546 = vunpack.c.l.b16 %v461
    %v547 = vunpack.c.h.b16 %v461
    %v548 = vunpack.c.l.b16 %v462
    %v549 = vunpack.c.h.b16 %v462
    %v550 = vunpack.c.l.b16 %v463
    %v551 = vunpack.c.h.b16 %v463
    %v552 = vunpack.c.l.b16 %v464
    %v553 = vunpack.c.h.b16 %v464
    %v554 = vunpack.c.l.b16 %v465
    %v555 = vunpack.c.h.b16 %v465
    %v556 = vunpack.c.l.b16 %v466
    %v557 = vunpack.c.h.b16 %v466
    %v558 = vunpack.c.l.b16 %v467
    %v559 = vunpack.c.h.b16 %v467
    %v560 = vunpack.c.l.b16 %v468
    %v561 = vunpack.c.h.b16 %v468
    %v562 = vunpack.c.l.b16 %v469
    %v563 = vunpack.c.h.b16 %v469
    %v564 = vunpack.c.l.b16 %v470
    %v565 = vunpack.c.h.b16 %v470
    %v566 = vunpack.c.l.b16 %v471
    %v567 = vunpack.c.h.b16 %v471
    %v568 = vunpack.c.l.b16 %v472
    %v569 = vunpack.c.h.b16 %v472
    %v570 = vunpack.c.l.b16 %v473
    %v571 = vunpack.c.h.b16 %v473
    %v572 = vunpack.c.l.b16 %v474
    %v573 = vunpack.c.h.b16 %v474
    %v574 = vunpack.c.l.b16 %v475
    %v575 = vunpack.c.h.b16 %v475
    %v576 = vunpack.c.l.b16 %v476
    %v577 = vunpack.c.h.b16 %v476
    %v578 = vunpack.c.l.b16 %v477
    %v579 = vunpack.c.h.b16 %v477
    %v580 = vunpack.c.l.b16 %v478
    %v581 = vunpack.c.h.b16 %v478
    %v582 = vunpack.c.l.b16 %v479
    %v583 = vunpack.c.h.b16 %v479
    %v584 = vunpack.c.l.b16 %v480
    %v585 = vunpack.c.h.b16 %v480
    %v586 = vunpack.c.l.b16 %v481
    %v587 = vunpack.c.h.b16 %v481
    %v588 = vunpack.c.l.b16 %v482
    %v589 = vunpack.c.h.b16 %v482
    %v590 = vunpack.c.l.b16 %v483
    %v591 = vunpack.c.h.b16 %v483
    %v592 = vpack.c.b16 %v530, %v528
    %v593 = vpack.c.b16 %v531, %v529
    %v594 = vpack.c.b16 %v534, %v532
    %v595 = vpack.c.b16 %v535, %v533
    %v596 = vpack.c.b16 %v538, %v536
    %v597 = vpack.c.b16 %v539, %v537
    %v598 = vpack.c.b16 %v542, %v540
    %v599 = vpack.c.b16 %v543, %v541
    %v600 = vpack.c.b16 %v546, %v544
    %v601 = vpack.c.b16 %v547, %v545
    %v602 = vpack.c.b16 %v550, %v548
    %v603 = vpack.c.b16 %v551, %v549
    %v604 = vpack.c.b16 %v554, %v552
    %v605 = vpack.c.b16 %v555, %v553
    %v606 = vpack.c.b16 %v558, %v556
    %v607 = vpack.c.b16 %v559, %v557
    %v608 = vpack.c.b16 %v562, %v560
    %v609 = vpack.c.b16 %v563, %v561
    %v610 = vpack.c.b16 %v566, %v564
    %v611 = vpack.c.b16 %v567, %v565
    %v612 = vpack.c.b16 %v570, %v568
    %v613 = vpack.c.b16 %v571, %v569
    %v614 = vpack.c.b16 %v574, %v572
    %v615 = vpack.c.b16 %v575, %v573
    %v616 = vpack.c.b16 %v578, %v576
    %v617 = vpack.c.b16 %v579, %v577
    %v618 = vpack.c.b16 %v582, %v580
    %v619 = vpack.c.b16 %v583, %v581
    %v620 = vpack.c.b16 %v586, %v584
    %v621 = vpack.c.b16 %v587, %v585
    %v622 = vpack.c.b16 %v590, %v588
    %v623 = vpack.c.b16 %v591, %v589
    %656 = vmatprep.subr.bf16.mxu0 %v593
    %657 = vmatpush1.bf16.msra.mxu0 %v592
    %658 = vmatprep.subr.bf16.mxu0 %v595
    %659 = vmatpush1.bf16.msra.mxu0 %v594
    %660 = vmatprep.subr.bf16.mxu0 %v597
    %661 = vmatpush1.bf16.msra.mxu0 %v596
    %662 = vmatprep.subr.bf16.mxu0 %v599
    %663 = vmatpush1.bf16.msra.mxu0 %v598
    %664 = vmatprep.subr.bf16.mxu0 %v601
    %665 = vmatpush1.bf16.msra.mxu0 %v600
    %666 = vmatprep.subr.bf16.mxu0 %v603
    %667 = vmatpush1.bf16.msra.mxu0 %v602
    %668 = vmatprep.subr.bf16.mxu0 %v605
    %669 = vmatpush1.bf16.msra.mxu0 %v604
    %670 = vmatprep.subr.bf16.mxu0 %v607
    %671 = vmatpush1.bf16.msra.mxu0 %v606
    %672 = vmatprep.subr.bf16.mxu0 %v609
    %673 = vmatpush1.bf16.msra.mxu0 %v608
    %674 = vmatprep.subr.bf16.mxu0 %v611
    %675 = vmatpush1.bf16.msra.mxu0 %v610
    %676 = vmatprep.subr.bf16.mxu0 %v613
    %677 = vmatpush1.bf16.msra.mxu0 %v612
    %678 = vmatprep.subr.bf16.mxu0 %v615
    %679 = vmatpush1.bf16.msra.mxu0 %v614
    %680 = vmatprep.subr.bf16.mxu0 %v617
    %681 = vmatpush1.bf16.msra.mxu0 %v616
    %682 = vmatprep.subr.bf16.mxu0 %v619
    %683 = vmatpush1.bf16.msra.mxu0 %v618
    %684 = vmatprep.subr.bf16.mxu0 %v621
    %685 = vmatpush1.bf16.msra.mxu0 %v620
    %686 = vmatprep.subr.bf16.mxu0 %v623
    %687 = vmatpush1.bf16.msra.mxu0 %v622
    %688 = vmatprep.mubr.bf16.mxu0 %v421
    %689 = vmatmul.mubr.bf16.gmra.mrb[0].mxu0 %v420
    %v690 = vpop.f32.mrb[0].mxu0
    %v691 = vadd.f32 %v489, %v690
    %v692 = vpop.f32.mrb[0].mxu0
    %v693 = vadd.f32 %v493, %v692
    %v694 = vpop.f32.mrb[0].mxu0
    %v695 = vadd.f32 %v489, %v694
    %v696 = vpop.f32.mrb[0].mxu0
    %v697 = vadd.f32 %v493, %v696
    %698 = vmatprep.mubr.bf16.mxu0 %v423
    %699 = vmatmul.mubr.bf16.gmra.mrb[0].mxu0 %v422
    %v700 = vpop.f32.mrb[0].mxu0
    %v701 = vadd.f32 %v489, %v700
    %v702 = vpop.f32.mrb[0].mxu0
    %v703 = vadd.f32 %v493, %v702
    %v704 = vpop.f32.mrb[0].mxu0
    %v705 = vadd.f32 %v489, %v704
    %v706 = vpop.f32.mrb[0].mxu0
    %v707 = vadd.f32 %v493, %v706
    %708 = vmatprep.mubr.bf16.mxu0 %v425
    %709 = vmatmul.mubr.bf16.gmra.mrb[0].mxu0 %v424
    %v710 = vpop.f32.mrb[0].mxu0
    %v711 = vadd.f32 %v489, %v710
    %v712 = vpop.f32.mrb[0].mxu0
    %v713 = vadd.f32 %v493, %v712
    %v714 = vpop.f32.mrb[0].mxu0
    %v715 = vadd.f32 %v489, %v714
    %v716 = vpop.f32.mrb[0].mxu0
    %v717 = vadd.f32 %v493, %v716
    %718 = vmatprep.mubr.bf16.mxu0 %v427
    %719 = vmatmul.mubr.bf16.gmra.mrb[0].mxu0 %v426
    %v720 = vpop.f32.mrb[0].mxu0
    %v721 = vadd.f32 %v489, %v720
    %v722 = vpop.f32.mrb[0].mxu0
    %v723 = vadd.f32 %v493, %v722
    %v724 = vpop.f32.mrb[0].mxu0
    %v725 = vadd.f32 %v489, %v724
    %v726 = vpop.f32.mrb[0].mxu0
    %v727 = vadd.f32 %v493, %v726
    %728 = vmatprep.mubr.bf16.mxu0 %v429
    %729 = vmatmul.mubr.bf16.gmra.mrb[0].mxu0 %v428
    %v730 = vpop.f32.mrb[0].mxu0
    %v731 = vadd.f32 %v489, %v730
    %v732 = vpop.f32.mrb[0].mxu0
    %v733 = vadd.f32 %v493, %v732
    %v734 = vpop.f32.mrb[0].mxu0
    %v735 = vadd.f32 %v489, %v734
    %v736 = vpop.f32.mrb[0].mxu0
    %v737 = vadd.f32 %v493, %v736
    %738 = vmatprep.mubr.bf16.mxu0 %v431
    %739 = vmatmul.mubr.bf16.gmra.mrb[0].mxu0 %v430
    %v740 = vpop.f32.mrb[0].mxu0
    %v741 = vadd.f32 %v489, %v740
    %v742 = vpop.f32.mrb[0].mxu0
    %v743 = vadd.f32 %v493, %v742
    %v744 = vpop.f32.mrb[0].mxu0
    %v745 = vadd.f32 %v489, %v744
    %v746 = vpop.f32.mrb[0].mxu0
    %v747 = vadd.f32 %v493, %v746
    %748 = vmatprep.mubr.bf16.mxu0 %v433
    %749 = vmatmul.mubr.bf16.gmra.mrb[0].mxu0 %v432
    %v750 = vpop.f32.mrb[0].mxu0
    %v751 = vadd.f32 %v489, %v750
    %v752 = vpop.f32.mrb[0].mxu0
    %v753 = vadd.f32 %v493, %v752
    %v754 = vpop.f32.mrb[0].mxu0
    %v755 = vadd.f32 %v489, %v754
    %v756 = vpop.f32.mrb[0].mxu0
    %v757 = vadd.f32 %v493, %v756
    %758 = vmatprep.mubr.bf16.mxu0 %v435
    %759 = vmatmul.mubr.bf16.gmra.mrb[0].mxu0 %v434
    %v760 = vpop.f32.mrb[0].mxu0
    %v761 = vadd.f32 %v489, %v760
    %v762 = vpop.f32.mrb[0].mxu0
    %v763 = vadd.f32 %v493, %v762
    %v764 = vpop.f32.mrb[0].mxu0
    %v765 = vadd.f32 %v489, %v764
    %v766 = vpop.f32.mrb[0].mxu0
    %v767 = vadd.f32 %v493, %v766
    %768 = vmatprep.mubr.bf16.mxu0 %v437
    %769 = vmatmul.mubr.bf16.gmra.mrb[0].mxu0 %v436
    %v770 = vpop.f32.mrb[0].mxu0
    %v771 = vadd.f32 %v489, %v770
    %v772 = vpop.f32.mrb[0].mxu0
    %v773 = vadd.f32 %v493, %v772
    %v774 = vpop.f32.mrb[0].mxu0
    %v775 = vadd.f32 %v489, %v774
    %v776 = vpop.f32.mrb[0].mxu0
    %v777 = vadd.f32 %v493, %v776
    %778 = vmatprep.mubr.bf16.mxu0 %v439
    %779 = vmatmul.mubr.bf16.gmra.mrb[0].mxu0 %v438
    %v780 = vpop.f32.mrb[0].mxu0
    %v781 = vadd.f32 %v489, %v780
    %v782 = vpop.f32.mrb[0].mxu0
    %v783 = vadd.f32 %v493, %v782
    %v784 = vpop.f32.mrb[0].mxu0
    %v785 = vadd.f32 %v489, %v784
    %v786 = vpop.f32.mrb[0].mxu0
    %v787 = vadd.f32 %v493, %v786
    %788 = vmatprep.mubr.bf16.mxu0 %v441
    %789 = vmatmul.mubr.bf16.gmra.mrb[0].mxu0 %v440
    %v790 = vpop.f32.mrb[0].mxu0
    %v791 = vadd.f32 %v489, %v790
    %v792 = vpop.f32.mrb[0].mxu0
    %v793 = vadd.f32 %v493, %v792
    %v794 = vpop.f32.mrb[0].mxu0
    %v795 = vadd.f32 %v489, %v794
    %v796 = vpop.f32.mrb[0].mxu0
    %v797 = vadd.f32 %v493, %v796
    %798 = vmatprep.mubr.bf16.mxu0 %v443
    %799 = vmatmul.mubr.bf16.gmra.mrb[0].mxu0 %v442
    %v800 = vpop.f32.mrb[0].mxu0
    %v801 = vadd.f32 %v489, %v800
    %v802 = vpop.f32.mrb[0].mxu0
    %v803 = vadd.f32 %v493, %v802
    %v804 = vpop.f32.mrb[0].mxu0
    %v805 = vadd.f32 %v489, %v804
    %v806 = vpop.f32.mrb[0].mxu0
    %v807 = vadd.f32 %v493, %v806
    %808 = vmatprep.mubr.bf16.mxu0 %v445
    %809 = vmatmul.mubr.bf16.gmra.mrb[0].mxu0 %v444
    %v810 = vpop.f32.mrb[0].mxu0
    %v811 = vadd.f32 %v489, %v810
    %v812 = vpop.f32.mrb[0].mxu0
    %v813 = vadd.f32 %v493, %v812
    %v814 = vpop.f32.mrb[0].mxu0
    %v815 = vadd.f32 %v489, %v814
    %v816 = vpop.f32.mrb[0].mxu0
    %v817 = vadd.f32 %v493, %v816
    %818 = vmatprep.mubr.bf16.mxu0 %v447
    %819 = vmatmul.mubr.bf16.gmra.mrb[0].mxu0 %v446
    %v820 = vpop.f32.mrb[0].mxu0
    %v821 = vadd.f32 %v489, %v820
    %v822 = vpop.f32.mrb[0].mxu0
    %v823 = vadd.f32 %v493, %v822
    %v824 = vpop.f32.mrb[0].mxu0
    %v825 = vadd.f32 %v489, %v824
    %v826 = vpop.f32.mrb[0].mxu0
    %v827 = vadd.f32 %v493, %v826
    %828 = vmatprep.mubr.bf16.mxu0 %v449
    %829 = vmatmul.mubr.bf16.gmra.mrb[0].mxu0 %v448
    %v830 = vpop.f32.mrb[0].mxu0
    %v831 = vadd.f32 %v489, %v830
    %v832 = vpop.f32.mrb[0].mxu0
    %v833 = vadd.f32 %v493, %v832
    %v834 = vpop.f32.mrb[0].mxu0
    %v835 = vadd.f32 %v489, %v834
    %v836 = vpop.f32.mrb[0].mxu0
    %v837 = vadd.f32 %v493, %v836
    %838 = vmatprep.mubr.bf16.mxu0 %v451
    %839 = vmatmul.mubr.bf16.gmra.mrb[0].mxu0 %v450
    %v840 = vpop.f32.mrb[0].mxu0
    %v841 = vadd.f32 %v489, %v840
    %v842 = vpop.f32.mrb[0].mxu0
    %v843 = vadd.f32 %v493, %v842
    %v844 = vpop.f32.mrb[0].mxu0
    %v845 = vadd.f32 %v489, %v844
    %v846 = vpop.f32.mrb[0].mxu0
    %v847 = vadd.f32 %v493, %v846
    %848 = vdwg.mxu0
    %v849 = vmax.f32 %v691, 0.0
    %v850 = vmax.f32 %v693, 0.0
    %v851 = vmax.f32 %v695, 0.0
    %v852 = vmax.f32 %v697, 0.0
    %v853 = vmax.f32 %v701, 0.0
    %v854 = vmax.f32 %v703, 0.0
    %v855 = vmax.f32 %v705, 0.0
    %v856 = vmax.f32 %v707, 0.0
    %v857 = vmax.f32 %v711, 0.0
    %v858 = vmax.f32 %v713, 0.0
    %v859 = vmax.f32 %v715, 0.0
    %v860 = vmax.f32 %v717, 0.0
    %v861 = vmax.f32 %v721, 0.0
    %v862 = vmax.f32 %v723, 0.0
    %v863 = vmax.f32 %v725, 0.0
    %v864 = vmax.f32 %v727, 0.0
    %v865 = vmax.f32 %v731, 0.0
    %v866 = vmax.f32 %v733, 0.0
    %v867 = vmax.f32 %v735, 0.0
    %v868 = vmax.f32 %v737, 0.0
    %v869 = vmax.f32 %v741, 0.0
    %v870 = vmax.f32 %v743, 0.0
    %v871 = vmax.f32 %v745, 0.0
    %v872 = vmax.f32 %v747, 0.0
    %v873 = vmax.f32 %v751, 0.0
    %v874 = vmax.f32 %v753, 0.0
    %v875 = vmax.f32 %v755, 0.0
    %v876 = vmax.f32 %v757, 0.0
    %v877 = vmax.f32 %v761, 0.0
    %v878 = vmax.f32 %v763, 0.0
    %v879 = vmax.f32 %v765, 0.0
    %v880 = vmax.f32 %v767, 0.0
    %v881 = vmax.f32 %v771, 0.0
    %v882 = vmax.f32 %v773, 0.0
    %v883 = vmax.f32 %v775, 0.0
    %v884 = vmax.f32 %v777, 0.0
    %v885 = vmax.f32 %v781, 0.0
    %v886 = vmax.f32 %v783, 0.0
    %v887 = vmax.f32 %v785, 0.0
    %v888 = vmax.f32 %v787, 0.0
    %v889 = vmax.f32 %v791, 0.0
    %v890 = vmax.f32 %v793, 0.0
    %v891 = vmax.f32 %v795, 0.0
    %v892 = vmax.f32 %v797, 0.0
    %v893 = vmax.f32 %v801, 0.0
    %v894 = vmax.f32 %v803, 0.0
    %v895 = vmax.f32 %v805, 0.0
    %v896 = vmax.f32 %v807, 0.0
    %v897 = vmax.f32 %v811, 0.0
    %v898 = vmax.f32 %v813, 0.0
    %v899 = vmax.f32 %v815, 0.0
    %v900 = vmax.f32 %v817, 0.0
    %v901 = vmax.f32 %v821, 0.0
    %v902 = vmax.f32 %v823, 0.0
    %v903 = vmax.f32 %v825, 0.0
    %v904 = vmax.f32 %v827, 0.0
    %v905 = vmax.f32 %v831, 0.0
    %v906 = vmax.f32 %v833, 0.0
    %v907 = vmax.f32 %v835, 0.0
    %v908 = vmax.f32 %v837, 0.0
    %v909 = vmax.f32 %v841, 0.0
    %v910 = vmax.f32 %v843, 0.0
    %v911 = vmax.f32 %v845, 0.0
    %v912 = vmax.f32 %v847, 0.0
    %v913 = vpack.c.bf16 %v851, %v849
    %v914 = vpack.c.bf16 %v852, %v850
    %v915 = vpack.c.bf16 %v855, %v853
    %v916 = vpack.c.bf16 %v856, %v854
    %v917 = vpack.c.bf16 %v859, %v857
    %v918 = vpack.c.bf16 %v860, %v858
    %v919 = vpack.c.bf16 %v863, %v861
    %v920 = vpack.c.bf16 %v864, %v862
    %v921 = vpack.c.bf16 %v867, %v865
    %v922 = vpack.c.bf16 %v868, %v866
    %v923 = vpack.c.bf16 %v871, %v869
    %v924 = vpack.c.bf16 %v872, %v870
    %v925 = vpack.c.bf16 %v875, %v873
    %v926 = vpack.c.bf16 %v876, %v874
    %v927 = vpack.c.bf16 %v879, %v877
    %v928 = vpack.c.bf16 %v880, %v878
    %v929 = vpack.c.bf16 %v883, %v881
    %v930 = vpack.c.bf16 %v884, %v882
    %v931 = vpack.c.bf16 %v887, %v885
    %v932 = vpack.c.bf16 %v888, %v886
    %v933 = vpack.c.bf16 %v891, %v889
    %v934 = vpack.c.bf16 %v892, %v890
    %v935 = vpack.c.bf16 %v895, %v893
    %v936 = vpack.c.bf16 %v896, %v894
    %v937 = vpack.c.bf16 %v899, %v897
    %v938 = vpack.c.bf16 %v900, %v898
    %v939 = vpack.c.bf16 %v903, %v901
    %v940 = vpack.c.bf16 %v904, %v902
    %v941 = vpack.c.bf16 %v907, %v905
    %v942 = vpack.c.bf16 %v908, %v906
    %v943 = vpack.c.bf16 %v911, %v909
    %v944 = vpack.c.bf16 %v912, %v910
    %v945 = vld [vmem:[#allocation2] sm:$0xf]
    %v946 = vld [vmem:[#allocation2 + $0x4] sm:$0xf]
    %v947 = vld [vmem:[#allocation2 + $0x8] sm:$0xf]
    %v948 = vld [vmem:[#allocation2 + $0xc] sm:$0xf]
    %v949 = vld [vmem:[#allocation2 + $0x10] sm:$0xf]
    %v950 = vld [vmem:[#allocation2 + $0x14] sm:$0xf]
    %v951 = vld [vmem:[#allocation2 + $0x18] sm:$0xf]
    %v952 = vld [vmem:[#allocation2 + $0x1c] sm:$0xf]
    %v953 = vld [vmem:[#allocation2 + $0x20] sm:$0xf]
    %v954 = vld [vmem:[#allocation2 + $0x24] sm:$0xf]
    %v955 = vld [vmem:[#allocation2 + $0x28] sm:$0xf]
    %v956 = vld [vmem:[#allocation2 + $0x2c] sm:$0xf]
    %v957 = vld [vmem:[#allocation2 + $0x30] sm:$0xf]
    %v958 = vld [vmem:[#allocation2 + $0x34] sm:$0xf]
    %v959 = vld [vmem:[#allocation2 + $0x38] sm:$0xf]
    %v960 = vld [vmem:[#allocation2 + $0x3c] sm:$0xf]
    %v961 = vld [vmem:[#allocation2 + $0x40] sm:$0xf]
    %v962 = vld [vmem:[#allocation2 + $0x44] sm:$0xf]
    %v963 = vld [vmem:[#allocation2 + $0x48] sm:$0xf]
    %v964 = vld [vmem:[#allocation2 + $0x4c] sm:$0xf]
    %v965 = vld [vmem:[#allocation2 + $0x50] sm:$0xf]
    %v966 = vld [vmem:[#allocation2 + $0x54] sm:$0xf]
    %v967 = vld [vmem:[#allocation2 + $0x58] sm:$0xf]
    %v968 = vld [vmem:[#allocation2 + $0x5c] sm:$0xf]
    %v969 = vld [vmem:[#allocation2 + $0x60] sm:$0xf]
    %v970 = vld [vmem:[#allocation2 + $0x64] sm:$0xf]
    %v971 = vld [vmem:[#allocation2 + $0x68] sm:$0xf]
    %v972 = vld [vmem:[#allocation2 + $0x6c] sm:$0xf]
    %v973 = vld [vmem:[#allocation2 + $0x70] sm:$0xf]
    %v974 = vld [vmem:[#allocation2 + $0x74] sm:$0xf]
    %v975 = vld [vmem:[#allocation2 + $0x78] sm:$0xf]
    %v976 = vld [vmem:[#allocation2 + $0x7c] sm:$0xf]
    %v977 = vld [vmem:[%s6] sm:$0x1]
    %v979 = vlaneseq
    %v980 = vshrl.u32 %v979, 7
    %v981 = vsub.s32 0, %v980
    %v982 = vrot.slane %v977, %v981
    %v1016 = vunpack.c.l.b16 %v945
    %v1017 = vunpack.c.l.b16 %v946
    %v1018 = vunpack.c.l.b16 %v947
    %v1019 = vunpack.c.l.b16 %v948
    %v1020 = vunpack.c.l.b16 %v949
    %v1021 = vunpack.c.l.b16 %v950
    %v1022 = vunpack.c.l.b16 %v951
    %v1023 = vunpack.c.l.b16 %v952
    %v1024 = vunpack.c.l.b16 %v953
    %v1025 = vunpack.c.l.b16 %v954
    %v1026 = vunpack.c.l.b16 %v955
    %v1027 = vunpack.c.l.b16 %v956
    %v1028 = vunpack.c.l.b16 %v957
    %v1029 = vunpack.c.l.b16 %v958
    %v1030 = vunpack.c.l.b16 %v959
    %v1031 = vunpack.c.l.b16 %v960
    %v1032 = vunpack.c.l.b16 %v961
    %v1033 = vunpack.c.l.b16 %v962
    %v1034 = vunpack.c.l.b16 %v963
    %v1035 = vunpack.c.l.b16 %v964
    %v1036 = vunpack.c.l.b16 %v965
    %v1037 = vunpack.c.l.b16 %v966
    %v1038 = vunpack.c.l.b16 %v967
    %v1039 = vunpack.c.l.b16 %v968
    %v1040 = vunpack.c.l.b16 %v969
    %v1041 = vunpack.c.l.b16 %v970
    %v1042 = vunpack.c.l.b16 %v971
    %v1043 = vunpack.c.l.b16 %v972
    %v1044 = vunpack.c.l.b16 %v973
    %v1045 = vunpack.c.l.b16 %v974
    %v1046 = vunpack.c.l.b16 %v975
    %v1047 = vunpack.c.l.b16 %v976
    %v1048 = vpack.c.b16 %v1017, %v1016
    %v1049 = vpack.c.b16 %v1019, %v1018
    %v1050 = vpack.c.b16 %v1021, %v1020
    %v1051 = vpack.c.b16 %v1023, %v1022
    %v1052 = vpack.c.b16 %v1025, %v1024
    %v1053 = vpack.c.b16 %v1027, %v1026
    %v1054 = vpack.c.b16 %v1029, %v1028
    %v1055 = vpack.c.b16 %v1031, %v1030
    %v1056 = vpack.c.b16 %v1033, %v1032
    %v1057 = vpack.c.b16 %v1035, %v1034
    %v1058 = vpack.c.b16 %v1037, %v1036
    %v1059 = vpack.c.b16 %v1039, %v1038
    %v1060 = vpack.c.b16 %v1041, %v1040
    %v1061 = vpack.c.b16 %v1043, %v1042
    %v1062 = vpack.c.b16 %v1045, %v1044
    %v1063 = vpack.c.b16 %v1047, %v1046
    %1080 = vmatprep.subr.bf16.mxu0 0
    %1081 = vmatpush1.bf16.msra.mxu0 %v1048
    %1082 = vmatprep.subr.bf16.mxu0 0
    %1083 = vmatpush1.bf16.msra.mxu0 %v1049
    %1084 = vmatprep.subr.bf16.mxu0 0
    %1085 = vmatpush1.bf16.msra.mxu0 %v1050
    %1086 = vmatprep.subr.bf16.mxu0 0
    %1087 = vmatpush1.bf16.msra.mxu0 %v1051
    %1088 = vmatprep.subr.bf16.mxu0 0
    %1089 = vmatpush1.bf16.msra.mxu0 %v1052
    %1090 = vmatprep.subr.bf16.mxu0 0
    %1091 = vmatpush1.bf16.msra.mxu0 %v1053
    %1092 = vmatprep.subr.bf16.mxu0 0
    %1093 = vmatpush1.bf16.msra.mxu0 %v1054
    %1094 = vmatprep.subr.bf16.mxu0 0
    %1095 = vmatpush1.bf16.msra.mxu0 %v1055
    %1096 = vmatprep.subr.bf16.mxu0 0
    %1097 = vmatpush1.bf16.msra.mxu0 %v1056
    %1098 = vmatprep.subr.bf16.mxu0 0
    %1099 = vmatpush1.bf16.msra.mxu0 %v1057
    %1100 = vmatprep.subr.bf16.mxu0 0
    %1101 = vmatpush1.bf16.msra.mxu0 %v1058
    %1102 = vmatprep.subr.bf16.mxu0 0
    %1103 = vmatpush1.bf16.msra.mxu0 %v1059
    %1104 = vmatprep.subr.bf16.mxu0 0
    %1105 = vmatpush1.bf16.msra.mxu0 %v1060
    %1106 = vmatprep.subr.bf16.mxu0 0
    %1107 = vmatpush1.bf16.msra.mxu0 %v1061
    %1108 = vmatprep.subr.bf16.mxu0 0
    %1109 = vmatpush1.bf16.msra.mxu0 %v1062
    %1110 = vmatprep.subr.bf16.mxu0 0
    %1111 = vmatpush1.bf16.msra.mxu0 %v1063
    %1112 = vmatprep.mubr.bf16.mxu0 %v914
    %1113 = vmatmul.mubr.bf16.gmra.mrb[0].mxu0 %v913
    %v1114 = vpop.f32.mrb[0].mxu0
    %v1115 = vadd.f32 %v982, %v1114
    %v1116 = vpop.f32.mrb[0].mxu0
    %v1117 = vpop.f32.mrb[0].mxu0
    %v1118 = vadd.f32 %v982, %v1117
    %v1119 = vpop.f32.mrb[0].mxu0
    %1120 = vmatprep.mubr.bf16.mxu0 %v916
    %1121 = vmatmul.mubr.bf16.gmra.mrb[0].mxu0 %v915
    %v1122 = vpop.f32.mrb[0].mxu0
    %v1123 = vadd.f32 %v982, %v1122
    %v1124 = vpop.f32.mrb[0].mxu0
    %v1125 = vpop.f32.mrb[0].mxu0
    %v1126 = vadd.f32 %v982, %v1125
    %v1127 = vpop.f32.mrb[0].mxu0
    %1128 = vmatprep.mubr.bf16.mxu0 %v918
    %1129 = vmatmul.mubr.bf16.gmra.mrb[0].mxu0 %v917
    %v1130 = vpop.f32.mrb[0].mxu0
    %v1131 = vadd.f32 %v982, %v1130
    %v1132 = vpop.f32.mrb[0].mxu0
    %v1133 = vpop.f32.mrb[0].mxu0
    %v1134 = vadd.f32 %v982, %v1133
    %v1135 = vpop.f32.mrb[0].mxu0
    %1136 = vmatprep.mubr.bf16.mxu0 %v920
    %1137 = vmatmul.mubr.bf16.gmra.mrb[0].mxu0 %v919
    %v1138 = vpop.f32.mrb[0].mxu0
    %v1139 = vadd.f32 %v982, %v1138
    %v1140 = vpop.f32.mrb[0].mxu0
    %v1141 = vpop.f32.mrb[0].mxu0
    %v1142 = vadd.f32 %v982, %v1141
    %v1143 = vpop.f32.mrb[0].mxu0
    %1144 = vmatprep.mubr.bf16.mxu0 %v922
    %1145 = vmatmul.mubr.bf16.gmra.mrb[0].mxu0 %v921
    %v1146 = vpop.f32.mrb[0].mxu0
    %v1147 = vadd.f32 %v982, %v1146
    %v1148 = vpop.f32.mrb[0].mxu0
    %v1149 = vpop.f32.mrb[0].mxu0
    %v1150 = vadd.f32 %v982, %v1149
    %v1151 = vpop.f32.mrb[0].mxu0
    %1152 = vmatprep.mubr.bf16.mxu0 %v924
    %1153 = vmatmul.mubr.bf16.gmra.mrb[0].mxu0 %v923
    %v1154 = vpop.f32.mrb[0].mxu0
    %v1155 = vadd.f32 %v982, %v1154
    %v1156 = vpop.f32.mrb[0].mxu0
    %v1157 = vpop.f32.mrb[0].mxu0
    %v1158 = vadd.f32 %v982, %v1157
    %v1159 = vpop.f32.mrb[0].mxu0
    %1160 = vmatprep.mubr.bf16.mxu0 %v926
    %1161 = vmatmul.mubr.bf16.gmra.mrb[0].mxu0 %v925
    %v1162 = vpop.f32.mrb[0].mxu0
    %v1163 = vadd.f32 %v982, %v1162
    %v1164 = vpop.f32.mrb[0].mxu0
    %v1165 = vpop.f32.mrb[0].mxu0
    %v1166 = vadd.f32 %v982, %v1165
    %v1167 = vpop.f32.mrb[0].mxu0
    %1168 = vmatprep.mubr.bf16.mxu0 %v928
    %1169 = vmatmul.mubr.bf16.gmra.mrb[0].mxu0 %v927
    %v1170 = vpop.f32.mrb[0].mxu0
    %v1171 = vadd.f32 %v982, %v1170
    %v1172 = vpop.f32.mrb[0].mxu0
    %v1173 = vpop.f32.mrb[0].mxu0
    %v1174 = vadd.f32 %v982, %v1173
    %v1175 = vpop.f32.mrb[0].mxu0
    %1176 = vmatprep.mubr.bf16.mxu0 %v930
    %1177 = vmatmul.mubr.bf16.gmra.mrb[0].mxu0 %v929
    %v1178 = vpop.f32.mrb[0].mxu0
    %v1179 = vadd.f32 %v982, %v1178
    %v1180 = vpop.f32.mrb[0].mxu0
    %v1181 = vpop.f32.mrb[0].mxu0
    %v1182 = vadd.f32 %v982, %v1181
    %v1183 = vpop.f32.mrb[0].mxu0
    %1184 = vmatprep.mubr.bf16.mxu0 %v932
    %1185 = vmatmul.mubr.bf16.gmra.mrb[0].mxu0 %v931
    %v1186 = vpop.f32.mrb[0].mxu0
    %v1187 = vadd.f32 %v982, %v1186
    %v1188 = vpop.f32.mrb[0].mxu0
    %v1189 = vpop.f32.mrb[0].mxu0
    %v1190 = vadd.f32 %v982, %v1189
    %v1191 = vpop.f32.mrb[0].mxu0
    %1192 = vmatprep.mubr.bf16.mxu0 %v934
    %1193 = vmatmul.mubr.bf16.gmra.mrb[0].mxu0 %v933
    %v1194 = vpop.f32.mrb[0].mxu0
    %v1195 = vadd.f32 %v982, %v1194
    %v1196 = vpop.f32.mrb[0].mxu0
    %v1197 = vpop.f32.mrb[0].mxu0
    %v1198 = vadd.f32 %v982, %v1197
    %v1199 = vpop.f32.mrb[0].mxu0
    %1200 = vmatprep.mubr.bf16.mxu0 %v936
    %1201 = vmatmul.mubr.bf16.gmra.mrb[0].mxu0 %v935
    %v1202 = vpop.f32.mrb[0].mxu0
    %v1203 = vadd.f32 %v982, %v1202
    %v1204 = vpop.f32.mrb[0].mxu0
    %v1205 = vpop.f32.mrb[0].mxu0
    %v1206 = vadd.f32 %v982, %v1205
    %v1207 = vpop.f32.mrb[0].mxu0
    %1208 = vmatprep.mubr.bf16.mxu0 %v938
    %1209 = vmatmul.mubr.bf16.gmra.mrb[0].mxu0 %v937
    %v1210 = vpop.f32.mrb[0].mxu0
    %v1211 = vadd.f32 %v982, %v1210
    %v1212 = vpop.f32.mrb[0].mxu0
    %v1213 = vpop.f32.mrb[0].mxu0
    %v1214 = vadd.f32 %v982, %v1213
    %v1215 = vpop.f32.mrb[0].mxu0
    %1216 = vmatprep.mubr.bf16.mxu0 %v940
    %1217 = vmatmul.mubr.bf16.gmra.mrb[0].mxu0 %v939
    %v1218 = vpop.f32.mrb[0].mxu0
    %v1219 = vadd.f32 %v982, %v1218
    %v1220 = vpop.f32.mrb[0].mxu0
    %v1221 = vpop.f32.mrb[0].mxu0
    %v1222 = vadd.f32 %v982, %v1221
    %v1223 = vpop.f32.mrb[0].mxu0
    %1224 = vmatprep.mubr.bf16.mxu0 %v942
    %1225 = vmatmul.mubr.bf16.gmra.mrb[0].mxu0 %v941
    %v1226 = vpop.f32.mrb[0].mxu0
    %v1227 = vadd.f32 %v982, %v1226
    %v1228 = vpop.f32.mrb[0].mxu0
    %v1229 = vpop.f32.mrb[0].mxu0
    %v1230 = vadd.f32 %v982, %v1229
    %v1231 = vpop.f32.mrb[0].mxu0
    %1232 = vmatprep.mubr.bf16.mxu0 %v944
    %1233 = vmatmul.mubr.bf16.gmra.mrb[0].mxu0 %v943
    %v1234 = vpop.f32.mrb[0].mxu0
    %v1235 = vadd.f32 %v982, %v1234
    %v1236 = vpop.f32.mrb[0].mxu0
    %v1237 = vpop.f32.mrb[0].mxu0
    %v1238 = vadd.f32 %v982, %v1237
    %v1239 = vpop.f32.mrb[0].mxu0
    %1240 = vdwg.mxu0
    %1241 = vst [vmem:[#allocation5] sm:$0xff] %v1115
    %1242 = vst [vmem:[#allocation5 + $0x8] sm:$0xff] %v1118
    %1243 = vst [vmem:[#allocation5 + $0x10] sm:$0xff] %v1123
    %1244 = vst [vmem:[#allocation5 + $0x18] sm:$0xff] %v1126
    %1245 = vst [vmem:[#allocation5 + $0x20] sm:$0xff] %v1131
    %1246 = vst [vmem:[#allocation5 + $0x28] sm:$0xff] %v1134
    %1247 = vst [vmem:[#allocation5 + $0x30] sm:$0xff] %v1139
    %1248 = vst [vmem:[#allocation5 + $0x38] sm:$0xff] %v1142
    %1249 = vst [vmem:[#allocation5 + $0x40] sm:$0xff] %v1147
    %1250 = vst [vmem:[#allocation5 + $0x48] sm:$0xff] %v1150
    %1251 = vst [vmem:[#allocation5 + $0x50] sm:$0xff] %v1155
    %1252 = vst [vmem:[#allocation5 + $0x58] sm:$0xff] %v1158
    %1253 = vst [vmem:[#allocation5 + $0x60] sm:$0xff] %v1163
    %1254 = vst [vmem:[#allocation5 + $0x68] sm:$0xff] %v1166
    %1255 = vst [vmem:[#allocation5 + $0x70] sm:$0xff] %v1171
    %1256 = vst [vmem:[#allocation5 + $0x78] sm:$0xff] %v1174
    %1257 = vst [vmem:[#allocation5 + $0x80] sm:$0xff] %v1179
    %1258 = vst [vmem:[#allocation5 + $0x88] sm:$0xff] %v1182
    %1259 = vst [vmem:[#allocation5 + $0x90] sm:$0xff] %v1187
    %1260 = vst [vmem:[#allocation5 + $0x98] sm:$0xff] %v1190
    %1261 = vst [vmem:[#allocation5 + $0xa0] sm:$0xff] %v1195
    %1262 = vst [vmem:[#allocation5 + $0xa8] sm:$0xff] %v1198
    %1263 = vst [vmem:[#allocation5 + $0xb0] sm:$0xff] %v1203
    %1264 = vst [vmem:[#allocation5 + $0xb8] sm:$0xff] %v1206
    %1265 = vst [vmem:[#allocation5 + $0xc0] sm:$0xff] %v1211
    %1266 = vst [vmem:[#allocation5 + $0xc8] sm:$0xff] %v1214
    %1267 = vst [vmem:[#allocation5 + $0xd0] sm:$0xff] %v1219
    %1268 = vst [vmem:[#allocation5 + $0xd8] sm:$0xff] %v1222
    %1269 = vst [vmem:[#allocation5 + $0xe0] sm:$0xff] %v1227
    %1270 = vst [vmem:[#allocation5 + $0xe8] sm:$0xff] %v1230
    %1271 = vst [vmem:[#allocation5 + $0xf0] sm:$0xff] %v1235
    %1272 = vst [vmem:[#allocation5 + $0xf8] sm:$0xff] %v1238
    // Predicated region
    $region34: #{tpu_custom_call.1} parent=1 // pred_check
      _
    $region35: #{tpu_custom_call.1} parent=1 // pred_check_branch
      %1274 = sbr.rel (0) target = $region37
    $region36: #{tpu_custom_call.1} parent=1 // pred_region
      %s1276 = ssub.s32 4096, 4096
      %1277 = vsyncadd [#allocation4], %s1276
      %s1278 = sshll.u32 [#allocation5], 4
      %s1279 = int_to_ptr.vmem [resolvable:$true] %s1278
      %1284 = dma.vmem_to_hbm [thread:$0]  %s1279, 4096, %s7, [#allocation4], 128, 128, 8
    $region37: #{tpu_custom_call.1} parent=1 // pred_fallthru
      _
    // Predicated region
    $region38: #{tpu_custom_call.1} parent=1 // pred_check
      _
    $region39: #{tpu_custom_call.1} parent=1 // pred_check_branch
      %1286 = sbr.rel (0) target = $region41
    $region40: #{tpu_custom_call.1} parent=1 // pred_region
      %1287 = dma.done [#allocation4], 4096
    $region41: #{tpu_custom_call.1} parent=1 // pred_fallthru
      _
    %1288 = vsyncpa [#allocation3], 1
    %1289 = vsyncpa [#allocation4], 1

// kernel: tpu_custom_call.1
$region0: #{tpu_custom_call.1}
  #allocation0 [shape = 'u32[]', space=smem, size = 0x4, offset = 0x4, fixed_abs, tag = 'smem constant byte address 0x4 - core index']
  #allocation1 [shape = 'u32[144,128]{1,0:T(1,128)}', space=vmem, size = 0x12000, scoped, tag = 'internal scratch']
  %s0 = inlined_call_operand.vmem [shape: f32[256,16], index: 0, kind: input, shape index: {}]
  %s1 = inlined_call_operand.vmem [shape: bf16[16,256], index: 1, kind: input, shape index: {}]
  %s2 = inlined_call_operand.vmem [shape: f32[1,256], index: 2, kind: input, shape index: {}]
  %s3 = inlined_call_operand.vmem [shape: bf16[256,256], index: 3, kind: input, shape index: {}]
  %s4 = inlined_call_operand.vmem [shape: f32[1,256], index: 4, kind: input, shape index: {}]
  %s5 = inlined_call_operand.hbm [shape: bf16[256,128], index: 5, kind: input, shape index: {}]
  %s6 = inlined_call_operand.vmem [shape: f32[1,128], index: 6, kind: input, shape index: {}]
  %s7 = inlined_call_operand.hbm [shape: f32[256,128], index: 7, kind: output, shape index: {}]
  %s8 = sld [smem:[#allocation0]]
  $region42: #{tpu_custom_call.1} parent=0
    _
  %s10 = ssub.s32 1, %s8
  %s11 = scalar_select 0, %s10, %s8
  $region1: #{tpu_custom_call.1} parent=0
    #allocation2 [shape = 'u8[65536]{0}', space=vmem, size = 0x10000, scoped, tag = 'input window, operand 5, single buffered']
    #allocation3 [shape = 's32[1]{0}', space=sflag, size = 0x4, scoped, tag = 'scoped memory for tpu_custom_call.1']
    #allocation4 [shape = 's32[1]{0}', space=sflag, size = 0x4, scoped, tag = 'scoped memory for tpu_custom_call.1']
    #allocation5 [shape = 'u8[131072]{0}', space=vmem, size = 0x20000, scoped, tag = 'output window, operand 0, single buffered']
    %12 = vsyncpa [#allocation3], 0
    %13 = vsyncpa [#allocation4], 0
    // Predicated region
    $region2: #{tpu_custom_call.1} parent=1 // pred_check
      _
    $region3: #{tpu_custom_call.1} parent=1 // pred_check_branch
      %15 = sbr.rel (0) target = $region5
    $region4: #{tpu_custom_call.1} parent=1 // pred_region
      _
    $region5: #{tpu_custom_call.1} parent=1 // pred_fallthru
      _
    // Predicated region
    $region6: #{tpu_custom_call.1} parent=1 // pred_check
      _
    $region7: #{tpu_custom_call.1} parent=1 // pred_check_branch
      %17 = sbr.rel (0) target = $region9
    $region8: #{tpu_custom_call.1} parent=1 // pred_region
      _
    $region9: #{tpu_custom_call.1} parent=1 // pred_fallthru
      _
    // Predicated region
    $region10: #{tpu_custom_call.1} parent=1 // pred_check
      _
    $region11: #{tpu_custom_call.1} parent=1 // pred_check_branch
      %19 = sbr.rel (0) target = $region13
    $region12: #{tpu_custom_call.1} parent=1 // pred_region
      _
    $region13: #{tpu_custom_call.1} parent=1 // pred_fallthru
      _
    // Predicated region
    $region14: #{tpu_custom_call.1} parent=1 // pred_check
      _
    $region15: #{tpu_custom_call.1} parent=1 // pred_check_branch
      %21 = sbr.rel (0) target = $region17
    $region16: #{tpu_custom_call.1} parent=1 // pred_region
      _
    $region17: #{tpu_custom_call.1} parent=1 // pred_fallthru
      _
    // Predicated region
    $region18: #{tpu_custom_call.1} parent=1 // pred_check
      _
    $region19: #{tpu_custom_call.1} parent=1 // pred_check_branch
      %23 = sbr.rel (0) target = $region21
    $region20: #{tpu_custom_call.1} parent=1 // pred_region
      _
    $region21: #{tpu_custom_call.1} parent=1 // pred_fallthru
      _
    // Predicated region
    $region22: #{tpu_custom_call.1} parent=1 // pred_check
      _
    $region23: #{tpu_custom_call.1} parent=1 // pred_check_branch
      %25 = sbr.rel (0) target = $region25
    $region24: #{tpu_custom_call.1} parent=1 // pred_region
      %s27 = ssub.s32 2048, 2048
      %28 = vsyncadd [#allocation3], %s27
      %s29 = sshll.u32 [#allocation2], 4
      %s30 = int_to_ptr.vmem [resolvable:$true] %s29
      %35 = dma.hbm_to_vmem [thread:$0]  %s5, 2048, %s30, [#allocation3], 64, 64, 4
    $region25: #{tpu_custom_call.1} parent=1 // pred_fallthru
      _
    // Predicated region
    $region26: #{tpu_custom_call.1} parent=1 // pred_check
      _
    $region27: #{tpu_custom_call.1} parent=1 // pred_check_branch
      %37 = sbr.rel (0) target = $region29
    $region28: #{tpu_custom_call.1} parent=1 // pred_region
      _
    $region29: #{tpu_custom_call.1} parent=1 // pred_fallthru
      _
    // Predicated region
    $region30: #{tpu_custom_call.1} parent=1 // pred_check
      _
    $region31: #{tpu_custom_call.1} parent=1 // pred_check_branch
      %39 = sbr.rel (0) target = $region33
    $region32: #{tpu_custom_call.1} parent=1 // pred_region
      %40 = dma.done [#allocation3], 2048
    $region33: #{tpu_custom_call.1} parent=1 // pred_fallthru
      _
    %v42 = vld [vmem:[%s0] sm:$0xff]
    %v43 = vld [vmem:[%s0 + $0x8] sm:$0xff]
    %v44 = vld [vmem:[%s0 + $0x10] sm:$0xff]
    %v45 = vld [vmem:[%s0 + $0x18] sm:$0xff]
    %v46 = vld [vmem:[%s0 + $0x20] sm:$0xff]
    %v47 = vld [vmem:[%s0 + $0x28] sm:$0xff]
    %v48 = vld [vmem:[%s0 + $0x30] sm:$0xff]
    %v49 = vld [vmem:[%s0 + $0x38] sm:$0xff]
    %v50 = vld [vmem:[%s0 + $0x40] sm:$0xff]
    %v51 = vld [vmem:[%s0 + $0x48] sm:$0xff]
    %v52 = vld [vmem:[%s0 + $0x50] sm:$0xff]
    %v53 = vld [vmem:[%s0 + $0x58] sm:$0xff]
    %v54 = vld [vmem:[%s0 + $0x60] sm:$0xff]
    %v55 = vld [vmem:[%s0 + $0x68] sm:$0xff]
    %v56 = vld [vmem:[%s0 + $0x70] sm:$0xff]
    %v57 = vld [vmem:[%s0 + $0x78] sm:$0xff]
    %v58 = vld [vmem:[%s0 + $0x80] sm:$0xff]
    %v59 = vld [vmem:[%s0 + $0x88] sm:$0xff]
    %v60 = vld [vmem:[%s0 + $0x90] sm:$0xff]
    %v61 = vld [vmem:[%s0 + $0x98] sm:$0xff]
    %v62 = vld [vmem:[%s0 + $0xa0] sm:$0xff]
    %v63 = vld [vmem:[%s0 + $0xa8] sm:$0xff]
    %v64 = vld [vmem:[%s0 + $0xb0] sm:$0xff]
    %v65 = vld [vmem:[%s0 + $0xb8] sm:$0xff]
    %v66 = vld [vmem:[%s0 + $0xc0] sm:$0xff]
    %v67 = vld [vmem:[%s0 + $0xc8] sm:$0xff]
    %v68 = vld [vmem:[%s0 + $0xd0] sm:$0xff]
    %v69 = vld [vmem:[%s0 + $0xd8] sm:$0xff]
    %v70 = vld [vmem:[%s0 + $0xe0] sm:$0xff]
    %v71 = vld [vmem:[%s0 + $0xe8] sm:$0xff]
    %v72 = vld [vmem:[%s0 + $0xf0] sm:$0xff]
    %v73 = vld [vmem:[%s0 + $0xf8] sm:$0xff]
    %v74 = vpack.c.bf16 %v43, %v42
    %v75 = vpack.c.bf16 %v45, %v44
    %v76 = vpack.c.bf16 %v47, %v46
    %v77 = vpack.c.bf16 %v49, %v48
    %v78 = vpack.c.bf16 %v51, %v50
    %v79 = vpack.c.bf16 %v53, %v52
    %v80 = vpack.c.bf16 %v55, %v54
    %v81 = vpack.c.bf16 %v57, %v56
    %v82 = vpack.c.bf16 %v59, %v58
    %v83 = vpack.c.bf16 %v61, %v60
    %v84 = vpack.c.bf16 %v63, %v62
    %v85 = vpack.c.bf16 %v65, %v64
    %v86 = vpack.c.bf16 %v67, %v66
    %v87 = vpack.c.bf16 %v69, %v68
    %v88 = vpack.c.bf16 %v71, %v70
    %v89 = vpack.c.bf16 %v73, %v72
    %v90 = vld [vmem:[%s1] sm:$0xff]
    %v91 = vld [vmem:[%s1 + $0x8] sm:$0xff]
    %v92 = vld [vmem:[%s2] sm:$0x3]
    %v94 = vlaneseq
    %v95 = vshrl.u32 %v94, 7
    %v96 = vsub.s32 0, %v95
    %v97 = vrot.slane %v92, %v96
    %v98 = vlaneseq
    %v99 = vshrl.u32 %v98, 7
    %v100 = vsub.s32 1, %v99
    %v101 = vrot.slane %v92, %v100
    %v106 = vunpack.c.l.b16 %v90
    %v107 = vunpack.c.h.b16 %v90
    %v108 = vunpack.c.l.b16 %v91
    %v109 = vunpack.c.h.b16 %v91
    %v110 = vpack.c.b16 %v108, %v106
    %v111 = vpack.c.b16 %v109, %v107
    %vm114 = vcmask 130048
    %v116 = vsel %vm114, %v74, 0
    %v119 = vsel %vm114, %v75, 0
    %v122 = vsel %vm114, %v76, 0
    %v125 = vsel %vm114, %v77, 0
    %v128 = vsel %vm114, %v78, 0
    %v131 = vsel %vm114, %v79, 0
    %v134 = vsel %vm114, %v80, 0
    %v137 = vsel %vm114, %v81, 0
    %v140 = vsel %vm114, %v82, 0
    %v143 = vsel %vm114, %v83, 0
    %v146 = vsel %vm114, %v84, 0
    %v149 = vsel %vm114, %v85, 0
    %v152 = vsel %vm114, %v86, 0
    %v155 = vsel %vm114, %v87, 0
    %v158 = vsel %vm114, %v88, 0
    %v161 = vsel %vm114, %v89, 0
    %163 = vmatprep.subr.bf16.mxu0 %v111
    %164 = vmatpush1.bf16.msra.mxu0 %v110
    %165 = vmatprep.subr.bf16.mxu0 0
    %166 = vmatpush1.bf16.msra.mxu0 0
    %167 = vmatprep.subr.bf16.mxu0 0
    %168 = vmatpush1.bf16.msra.mxu0 0
    %169 = vmatprep.subr.bf16.mxu0 0
    %170 = vmatpush1.bf16.msra.mxu0 0
    %171 = vmatprep.subr.bf16.mxu0 0
    %172 = vmatpush1.bf16.msra.mxu0 0
    %173 = vmatprep.subr.bf16.mxu0 0
    %174 = vmatpush1.bf16.msra.mxu0 0
    %175 = vmatprep.subr.bf16.mxu0 0
    %176 = vmatpush1.bf16.msra.mxu0 0
    %177 = vmatprep.subr.bf16.mxu0 0
    %178 = vmatpush1.bf16.msra.mxu0 0
    %179 = vmatprep.subr.bf16.mxu0 0
    %180 = vmatpush1.bf16.msra.mxu0 0
    %181 = vmatprep.subr.bf16.mxu0 0
    %182 = vmatpush1.bf16.msra.mxu0 0
    %183 = vmatprep.subr.bf16.mxu0 0
    %184 = vmatpush1.bf16.msra.mxu0 0
    %185 = vmatprep.subr.bf16.mxu0 0
    %186 = vmatpush1.bf16.msra.mxu0 0
    %187 = vmatprep.subr.bf16.mxu0 0
    %188 = vmatpush1.bf16.msra.mxu0 0
    %189 = vmatprep.subr.bf16.mxu0 0
    %190 = vmatpush1.bf16.msra.mxu0 0
    %191 = vmatprep.subr.bf16.mxu0 0
    %192 = vmatpush1.bf16.msra.mxu0 0
    %193 = vmatprep.subr.bf16.mxu0 0
    %194 = vmatpush1.bf16.msra.mxu0 0
    %195 = vmatprep.mubr.bf16.mxu0 0
    %196 = vmatmul.mubr.bf16.gmra.mrb[0].mxu0 %v116
    %v197 = vpop.f32.mrb[0].mxu0
    %v198 = vadd.f32 %v97, %v197
    %v199 = vpop.f32.mrb[0].mxu0
    %v200 = vadd.f32 %v101, %v199
    %v201 = vpop.f32.mrb[0].mxu0
    %v202 = vadd.f32 %v97, %v201
    %v203 = vpop.f32.mrb[0].mxu0
    %v204 = vadd.f32 %v101, %v203
    %205 = vmatprep.mubr.bf16.mxu0 0
    %206 = vmatmul.mubr.bf16.gmra.mrb[0].mxu0 %v119
    %v207 = vpop.f32.mrb[0].mxu0
    %v208 = vadd.f32 %v97, %v207
    %v209 = vpop.f32.mrb[0].mxu0
    %v210 = vadd.f32 %v101, %v209
    %v211 = vpop.f32.mrb[0].mxu0
    %v212 = vadd.f32 %v97, %v211
    %v213 = vpop.f32.mrb[0].mxu0
    %v214 = vadd.f32 %v101, %v213
    %215 = vmatprep.mubr.bf16.mxu0 0
    %216 = vmatmul.mubr.bf16.gmra.mrb[0].mxu0 %v122
    %v217 = vpop.f32.mrb[0].mxu0
    %v218 = vadd.f32 %v97, %v217
    %v219 = vpop.f32.mrb[0].mxu0
    %v220 = vadd.f32 %v101, %v219
    %v221 = vpop.f32.mrb[0].mxu0
    %v222 = vadd.f32 %v97, %v221
    %v223 = vpop.f32.mrb[0].mxu0
    %v224 = vadd.f32 %v101, %v223
    %225 = vmatprep.mubr.bf16.mxu0 0
    %226 = vmatmul.mubr.bf16.gmra.mrb[0].mxu0 %v125
    %v227 = vpop.f32.mrb[0].mxu0
    %v228 = vadd.f32 %v97, %v227
    %v229 = vpop.f32.mrb[0].mxu0
    %v230 = vadd.f32 %v101, %v229
    %v231 = vpop.f32.mrb[0].mxu0
    %v232 = vadd.f32 %v97, %v231
    %v233 = vpop.f32.mrb[0].mxu0
    %v234 = vadd.f32 %v101, %v233
    %235 = vmatprep.mubr.bf16.mxu0 0
    %236 = vmatmul.mubr.bf16.gmra.mrb[0].mxu0 %v128
    %v237 = vpop.f32.mrb[0].mxu0
    %v238 = vadd.f32 %v97, %v237
    %v239 = vpop.f32.mrb[0].mxu0
    %v240 = vadd.f32 %v101, %v239
    %v241 = vpop.f32.mrb[0].mxu0
    %v242 = vadd.f32 %v97, %v241
    %v243 = vpop.f32.mrb[0].mxu0
    %v244 = vadd.f32 %v101, %v243
    %245 = vmatprep.mubr.bf16.mxu0 0
    %246 = vmatmul.mubr.bf16.gmra.mrb[0].mxu0 %v131
    %v247 = vpop.f32.mrb[0].mxu0
    %v248 = vadd.f32 %v97, %v247
    %v249 = vpop.f32.mrb[0].mxu0
    %v250 = vadd.f32 %v101, %v249
    %v251 = vpop.f32.mrb[0].mxu0
    %v252 = vadd.f32 %v97, %v251
    %v253 = vpop.f32.mrb[0].mxu0
    %v254 = vadd.f32 %v101, %v253
    %255 = vmatprep.mubr.bf16.mxu0 0
    %256 = vmatmul.mubr.bf16.gmra.mrb[0].mxu0 %v134
    %v257 = vpop.f32.mrb[0].mxu0
    %v258 = vadd.f32 %v97, %v257
    %v259 = vpop.f32.mrb[0].mxu0
    %v260 = vadd.f32 %v101, %v259
    %v261 = vpop.f32.mrb[0].mxu0
    %v262 = vadd.f32 %v97, %v261
    %v263 = vpop.f32.mrb[0].mxu0
    %v264 = vadd.f32 %v101, %v263
    %265 = vmatprep.mubr.bf16.mxu0 0
    %266 = vmatmul.mubr.bf16.gmra.mrb[0].mxu0 %v137
    %v267 = vpop.f32.mrb[0].mxu0
    %v268 = vadd.f32 %v97, %v267
    %v269 = vpop.f32.mrb[0].mxu0
    %v270 = vadd.f32 %v101, %v269
    %v271 = vpop.f32.mrb[0].mxu0
    %v272 = vadd.f32 %v97, %v271
    %v273 = vpop.f32.mrb[0].mxu0
    %v274 = vadd.f32 %v101, %v273
    %275 = vmatprep.mubr.bf16.mxu0 0
    %276 = vmatmul.mubr.bf16.gmra.mrb[0].mxu0 %v140
    %v277 = vpop.f32.mrb[0].mxu0
    %v278 = vadd.f32 %v97, %v277
    %v279 = vpop.f32.mrb[0].mxu0
    %v280 = vadd.f32 %v101, %v279
    %v281 = vpop.f32.mrb[0].mxu0
    %v282 = vadd.f32 %v97, %v281
    %v283 = vpop.f32.mrb[0].mxu0
    %v284 = vadd.f32 %v101, %v283
    %285 = vmatprep.mubr.bf16.mxu0 0
    %286 = vmatmul.mubr.bf16.gmra.mrb[0].mxu0 %v143
    %v287 = vpop.f32.mrb[0].mxu0
    %v288 = vadd.f32 %v97, %v287
    %v289 = vpop.f32.mrb[0].mxu0
    %v290 = vadd.f32 %v101, %v289
    %v291 = vpop.f32.mrb[0].mxu0
    %v292 = vadd.f32 %v97, %v291
    %v293 = vpop.f32.mrb[0].mxu0
    %v294 = vadd.f32 %v101, %v293
    %295 = vmatprep.mubr.bf16.mxu0 0
    %296 = vmatmul.mubr.bf16.gmra.mrb[0].mxu0 %v146
    %v297 = vpop.f32.mrb[0].mxu0
    %v298 = vadd.f32 %v97, %v297
    %v299 = vpop.f32.mrb[0].mxu0
    %v300 = vadd.f32 %v101, %v299
    %v301 = vpop.f32.mrb[0].mxu0
    %v302 = vadd.f32 %v97, %v301
    %v303 = vpop.f32.mrb[0].mxu0
    %v304 = vadd.f32 %v101, %v303
    %305 = vmatprep.mubr.bf16.mxu0 0
    %306 = vmatmul.mubr.bf16.gmra.mrb[0].mxu0 %v149
    %v307 = vpop.f32.mrb[0].mxu0
    %v308 = vadd.f32 %v97, %v307
    %v309 = vpop.f32.mrb[0].mxu0
    %v310 = vadd.f32 %v101, %v309
    %v311 = vpop.f32.mrb[0].mxu0
    %v312 = vadd.f32 %v97, %v311
    %v313 = vpop.f32.mrb[0].mxu0
    %v314 = vadd.f32 %v101, %v313
    %315 = vmatprep.mubr.bf16.mxu0 0
    %316 = vmatmul.mubr.bf16.gmra.mrb[0].mxu0 %v152
    %v317 = vpop.f32.mrb[0].mxu0
    %v318 = vadd.f32 %v97, %v317
    %v319 = vpop.f32.mrb[0].mxu0
    %v320 = vadd.f32 %v101, %v319
    %v321 = vpop.f32.mrb[0].mxu0
    %v322 = vadd.f32 %v97, %v321
    %v323 = vpop.f32.mrb[0].mxu0
    %v324 = vadd.f32 %v101, %v323
    %325 = vmatprep.mubr.bf16.mxu0 0
    %326 = vmatmul.mubr.bf16.gmra.mrb[0].mxu0 %v155
    %v327 = vpop.f32.mrb[0].mxu0
    %v328 = vadd.f32 %v97, %v327
    %v329 = vpop.f32.mrb[0].mxu0
    %v330 = vadd.f32 %v101, %v329
    %v331 = vpop.f32.mrb[0].mxu0
    %v332 = vadd.f32 %v97, %v331
    %v333 = vpop.f32.mrb[0].mxu0
    %v334 = vadd.f32 %v101, %v333
    %335 = vmatprep.mubr.bf16.mxu0 0
    %336 = vmatmul.mubr.bf16.gmra.mrb[0].mxu0 %v158
    %v337 = vpop.f32.mrb[0].mxu0
    %v338 = vadd.f32 %v97, %v337
    %v339 = vpop.f32.mrb[0].mxu0
    %v340 = vadd.f32 %v101, %v339
    %v341 = vpop.f32.mrb[0].mxu0
    %v342 = vadd.f32 %v97, %v341
    %v343 = vpop.f32.mrb[0].mxu0
    %v344 = vadd.f32 %v101, %v343
    %345 = vmatprep.mubr.bf16.mxu0 0
    %346 = vmatmul.mubr.bf16.gmra.mrb[0].mxu0 %v161
    %v347 = vpop.f32.mrb[0].mxu0
    %v348 = vadd.f32 %v97, %v347
    %v349 = vpop.f32.mrb[0].mxu0
    %v350 = vadd.f32 %v101, %v349
    %v351 = vpop.f32.mrb[0].mxu0
    %v352 = vadd.f32 %v97, %v351
    %v353 = vpop.f32.mrb[0].mxu0
    %v354 = vadd.f32 %v101, %v353
    %355 = vdwg.mxu0
    %v356 = vmax.f32 %v198, 0.0
    %v357 = vmax.f32 %v200, 0.0
    %v358 = vmax.f32 %v202, 0.0
    %v359 = vmax.f32 %v204, 0.0
    %v360 = vmax.f32 %v208, 0.0
    %v361 = vmax.f32 %v210, 0.0
    %v362 = vmax.f32 %v212, 0.0
    %v363 = vmax.f32 %v214, 0.0
    %v364 = vmax.f32 %v218, 0.0
    %v365 = vmax.f32 %v220, 0.0
    %v366 = vmax.f32 %v222, 0.0
    %v367 = vmax.f32 %v224, 0.0
    %v368 = vmax.f32 %v228, 0.0
    %v369 = vmax.f32 %v230, 0.0
    %v370 = vmax.f32 %v232, 0.0
    %v371 = vmax.f32 %v234, 0.0
    %v372 = vmax.f32 %v238, 0.0
    %v373 = vmax.f32 %v240, 0.0
    %v374 = vmax.f32 %v242, 0.0
    %v375 = vmax.f32 %v244, 0.0
    %v376 = vmax.f32 %v248, 0.0
    %v377 = vmax.f32 %v250, 0.0
    %v378 = vmax.f32 %v252, 0.0
    %v379 = vmax.f32 %v254, 0.0
    %v380 = vmax.f32 %v258, 0.0
    %v381 = vmax.f32 %v260, 0.0
    %v382 = vmax.f32 %v262, 0.0
    %v383 = vmax.f32 %v264, 0.0
    %v384 = vmax.f32 %v268, 0.0
    %v385 = vmax.f32 %v270, 0.0
    %v386 = vmax.f32 %v272, 0.0
    %v387 = vmax.f32 %v274, 0.0
    %v388 = vmax.f32 %v278, 0.0
    %v389 = vmax.f32 %v280, 0.0
    %v390 = vmax.f32 %v282, 0.0
    %v391 = vmax.f32 %v284, 0.0
    %v392 = vmax.f32 %v288, 0.0
    %v393 = vmax.f32 %v290, 0.0
    %v394 = vmax.f32 %v292, 0.0
    %v395 = vmax.f32 %v294, 0.0
    %v396 = vmax.f32 %v298, 0.0
    %v397 = vmax.f32 %v300, 0.0
    %v398 = vmax.f32 %v302, 0.0
    %v399 = vmax.f32 %v304, 0.0
    %v400 = vmax.f32 %v308, 0.0
    %v401 = vmax.f32 %v310, 0.0
    %v402 = vmax.f32 %v312, 0.0
    %v403 = vmax.f32 %v314, 0.0
    %v404 = vmax.f32 %v318, 0.0
    %v405 = vmax.f32 %v320, 0.0
    %v406 = vmax.f32 %v322, 0.0
    %v407 = vmax.f32 %v324, 0.0
    %v408 = vmax.f32 %v328, 0.0
    %v409 = vmax.f32 %v330, 0.0
    %v410 = vmax.f32 %v332, 0.0
    %v411 = vmax.f32 %v334, 0.0
    %v412 = vmax.f32 %v338, 0.0
    %v413 = vmax.f32 %v340, 0.0
    %v414 = vmax.f32 %v342, 0.0
    %v415 = vmax.f32 %v344, 0.0
    %v416 = vmax.f32 %v348, 0.0
    %v417 = vmax.f32 %v350, 0.0
    %v418 = vmax.f32 %v352, 0.0
    %v419 = vmax.f32 %v354, 0.0
    %v420 = vpack.c.bf16 %v358, %v356
    %v421 = vpack.c.bf16 %v359, %v357
    %v422 = vpack.c.bf16 %v362, %v360
    %v423 = vpack.c.bf16 %v363, %v361
    %v424 = vpack.c.bf16 %v366, %v364
    %v425 = vpack.c.bf16 %v367, %v365
    %v426 = vpack.c.bf16 %v370, %v368
    %v427 = vpack.c.bf16 %v371, %v369
    %v428 = vpack.c.bf16 %v374, %v372
    %v429 = vpack.c.bf16 %v375, %v373
    %v430 = vpack.c.bf16 %v378, %v376
    %v431 = vpack.c.bf16 %v379, %v377
    %v432 = vpack.c.bf16 %v382, %v380
    %v433 = vpack.c.bf16 %v383, %v381
    %v434 = vpack.c.bf16 %v386, %v384
    %v435 = vpack.c.bf16 %v387, %v385
    %v436 = vpack.c.bf16 %v390, %v388
    %v437 = vpack.c.bf16 %v391, %v389
    %v438 = vpack.c.bf16 %v394, %v392
    %v439 = vpack.c.bf16 %v395, %v393
    %v440 = vpack.c.bf16 %v398, %v396
    %v441 = vpack.c.bf16 %v399, %v397
    %v442 = vpack.c.bf16 %v402, %v400
    %v443 = vpack.c.bf16 %v403, %v401
    %v444 = vpack.c.bf16 %v406, %v404
    %v445 = vpack.c.bf16 %v407, %v405
    %v446 = vpack.c.bf16 %v410, %v408
    %v447 = vpack.c.bf16 %v411, %v409
    %v448 = vpack.c.bf16 %v414, %v412
    %v449 = vpack.c.bf16 %v415, %v413
    %v450 = vpack.c.bf16 %v418, %v416
    %v451 = vpack.c.bf16 %v419, %v417
    %v452 = vld [vmem:[%s3] sm:$0xff]
    %v453 = vld [vmem:[%s3 + $0x8] sm:$0xff]
    %v454 = vld [vmem:[%s3 + $0x10] sm:$0xff]
    %v455 = vld [vmem:[%s3 + $0x18] sm:$0xff]
    %v456 = vld [vmem:[%s3 + $0x20] sm:$0xff]
    %v457 = vld [vmem:[%s3 + $0x28] sm:$0xff]
    %v458 = vld [vmem:[%s3 + $0x30] sm:$0xff]
    %v459 = vld [vmem:[%s3 + $0x38] sm:$0xff]
    %v460 = vld [vmem:[%s3 + $0x40] sm:$0xff]
    %v461 = vld [vmem:[%s3 + $0x48] sm:$0xff]
    %v462 = vld [vmem:[%s3 + $0x50] sm:$0xff]
    %v463 = vld [vmem:[%s3 + $0x58] sm:$0xff]
    %v464 = vld [vmem:[%s3 + $0x60] sm:$0xff]
    %v465 = vld [vmem:[%s3 + $0x68] sm:$0xff]
    %v466 = vld [vmem:[%s3 + $0x70] sm:$0xff]
    %v467 = vld [vmem:[%s3 + $0x78] sm:$0xff]
    %v468 = vld [vmem:[%s3 + $0x80] sm:$0xff]
    %v469 = vld [vmem:[%s3 + $0x88] sm:$0xff]
    %v470 = vld [vmem:[%s3 + $0x90] sm:$0xff]
    %v471 = vld [vmem:[%s3 + $0x98] sm:$0xff]
    %v472 = vld [vmem:[%s3 + $0xa0] sm:$0xff]
    %v473 = vld [vmem:[%s3 + $0xa8] sm:$0xff]
    %v474 = vld [vmem:[%s3 + $0xb0] sm:$0xff]
    %v475 = vld [vmem:[%s3 + $0xb8] sm:$0xff]
    %v476 = vld [vmem:[%s3 + $0xc0] sm:$0xff]
    %v477 = vld [vmem:[%s3 + $0xc8] sm:$0xff]
    %v478 = vld [vmem:[%s3 + $0xd0] sm:$0xff]
    %v479 = vld [vmem:[%s3 + $0xd8] sm:$0xff]
    %v480 = vld [vmem:[%s3 + $0xe0] sm:$0xff]
    %v481 = vld [vmem:[%s3 + $0xe8] sm:$0xff]
    %v482 = vld [vmem:[%s3 + $0xf0] sm:$0xff]
    %v483 = vld [vmem:[%s3 + $0xf8] sm:$0xff]
    %v484 = vld [vmem:[%s4] sm:$0x3]
    %v486 = vlaneseq
    %v487 = vshrl.u32 %v486, 7
    %v488 = vsub.s32 0, %v487
    %v489 = vrot.slane %v484, %v488
    %v490 = vlaneseq
    %v491 = vshrl.u32 %v490, 7
    %v492 = vsub.s32 1, %v491
    %v493 = vrot.slane %v484, %v492
    %v528 = vunpack.c.l.b16 %v452
    %v529 = vunpack.c.h.b16 %v452
    %v530 = vunpack.c.l.b16 %v453
    %v531 = vunpack.c.h.b16 %v453
    %v532 = vunpack.c.l.b16 %v454
    %v533 = vunpack.c.h.b16 %v454
    %v534 = vunpack.c.l.b16 %v455
    %v535 = vunpack.c.h.b16 %v455
    %v536 = vunpack.c.l.b16 %v456
    %v537 = vunpack.c.h.b16 %v456
    %v538 = vunpack.c.l.b16 %v457
    %v539 = vunpack.c.h.b16 %v457
    %v540 = vunpack.c.l.b16 %v458
    %v541 = vunpack.c.h.b16 %v458
    %v542 = vunpack.c.l.b16 %v459
    %v543 = vunpack.c.h.b16 %v459
    %v544 = vunpack.c.l.b16 %v460
    %v545 = vunpack.c.h.b16 %v460
    %v546 = vunpack.c.l.b16 %v461
    %v547 = vunpack.c.h.b16 %v461
    %v548 = vunpack.c.l.b16 %v462
    %v549 = vunpack.c.h.b16 %v462
    %v550 = vunpack.c.l.b16 %v463
    %v551 = vunpack.c.h.b16 %v463
    %v552 = vunpack.c.l.b16 %v464
    %v553 = vunpack.c.h.b16 %v464
    %v554 = vunpack.c.l.b16 %v465
    %v555 = vunpack.c.h.b16 %v465
    %v556 = vunpack.c.l.b16 %v466
    %v557 = vunpack.c.h.b16 %v466
    %v558 = vunpack.c.l.b16 %v467
    %v559 = vunpack.c.h.b16 %v467
    %v560 = vunpack.c.l.b16 %v468
    %v561 = vunpack.c.h.b16 %v468
    %v562 = vunpack.c.l.b16 %v469
    %v563 = vunpack.c.h.b16 %v469
    %v564 = vunpack.c.l.b16 %v470
    %v565 = vunpack.c.h.b16 %v470
    %v566 = vunpack.c.l.b16 %v471
    %v567 = vunpack.c.h.b16 %v471
    %v568 = vunpack.c.l.b16 %v472
    %v569 = vunpack.c.h.b16 %v472
    %v570 = vunpack.c.l.b16 %v473
    %v571 = vunpack.c.h.b16 %v473
    %v572 = vunpack.c.l.b16 %v474
    %v573 = vunpack.c.h.b16 %v474
    %v574 = vunpack.c.l.b16 %v475
    %v575 = vunpack.c.h.b16 %v475
    %v576 = vunpack.c.l.b16 %v476
    %v577 = vunpack.c.h.b16 %v476
    %v578 = vunpack.c.l.b16 %v477
    %v579 = vunpack.c.h.b16 %v477
    %v580 = vunpack.c.l.b16 %v478
    %v581 = vunpack.c.h.b16 %v478
    %v582 = vunpack.c.l.b16 %v479
    %v583 = vunpack.c.h.b16 %v479
    %v584 = vunpack.c.l.b16 %v480
    %v585 = vunpack.c.h.b16 %v480
    %v586 = vunpack.c.l.b16 %v481
    %v587 = vunpack.c.h.b16 %v481
    %v588 = vunpack.c.l.b16 %v482
    %v589 = vunpack.c.h.b16 %v482
    %v590 = vunpack.c.l.b16 %v483
    %v591 = vunpack.c.h.b16 %v483
    %v592 = vpack.c.b16 %v530, %v528
    %v593 = vpack.c.b16 %v531, %v529
    %v594 = vpack.c.b16 %v534, %v532
    %v595 = vpack.c.b16 %v535, %v533
    %v596 = vpack.c.b16 %v538, %v536
    %v597 = vpack.c.b16 %v539, %v537
    %v598 = vpack.c.b16 %v542, %v540
    %v599 = vpack.c.b16 %v543, %v541
    %v600 = vpack.c.b16 %v546, %v544
    %v601 = vpack.c.b16 %v547, %v545
    %v602 = vpack.c.b16 %v550, %v548
    %v603 = vpack.c.b16 %v551, %v549
    %v604 = vpack.c.b16 %v554, %v552
    %v605 = vpack.c.b16 %v555, %v553
    %v606 = vpack.c.b16 %v558, %v556
    %v607 = vpack.c.b16 %v559, %v557
    %v608 = vpack.c.b16 %v562, %v560
    %v609 = vpack.c.b16 %v563, %v561
    %v610 = vpack.c.b16 %v566, %v564
    %v611 = vpack.c.b16 %v567, %v565
    %v612 = vpack.c.b16 %v570, %v568
    %v613 = vpack.c.b16 %v571, %v569
    %v614 = vpack.c.b16 %v574, %v572
    %v615 = vpack.c.b16 %v575, %v573
    %v616 = vpack.c.b16 %v578, %v576
    %v617 = vpack.c.b16 %v579, %v577
    %v618 = vpack.c.b16 %v582, %v580
    %v619 = vpack.c.b16 %v583, %v581
    %v620 = vpack.c.b16 %v586, %v584
    %v621 = vpack.c.b16 %v587, %v585
    %v622 = vpack.c.b16 %v590, %v588
    %v623 = vpack.c.b16 %v591, %v589
    %656 = vmatprep.subr.bf16.mxu0 %v593
    %657 = vmatpush1.bf16.msra.mxu0 %v592
    %658 = vmatprep.subr.bf16.mxu0 %v595
    %659 = vmatpush1.bf16.msra.mxu0 %v594
    %660 = vmatprep.subr.bf16.mxu0 %v597
    %661 = vmatpush1.bf16.msra.mxu0 %v596
    %662 = vmatprep.subr.bf16.mxu0 %v599
    %663 = vmatpush1.bf16.msra.mxu0 %v598
    %664 = vmatprep.subr.bf16.mxu0 %v601
    %665 = vmatpush1.bf16.msra.mxu0 %v600
    %666 = vmatprep.subr.bf16.mxu0 %v603
    %667 = vmatpush1.bf16.msra.mxu0 %v602
    %668 = vmatprep.subr.bf16.mxu0 %v605
    %669 = vmatpush1.bf16.msra.mxu0 %v604
    %670 = vmatprep.subr.bf16.mxu0 %v607
    %671 = vmatpush1.bf16.msra.mxu0 %v606
    %672 = vmatprep.subr.bf16.mxu0 %v609
    %673 = vmatpush1.bf16.msra.mxu0 %v608
    %674 = vmatprep.subr.bf16.mxu0 %v611
    %675 = vmatpush1.bf16.msra.mxu0 %v610
    %676 = vmatprep.subr.bf16.mxu0 %v613
    %677 = vmatpush1.bf16.msra.mxu0 %v612
    %678 = vmatprep.subr.bf16.mxu0 %v615
    %679 = vmatpush1.bf16.msra.mxu0 %v614
    %680 = vmatprep.subr.bf16.mxu0 %v617
    %681 = vmatpush1.bf16.msra.mxu0 %v616
    %682 = vmatprep.subr.bf16.mxu0 %v619
    %683 = vmatpush1.bf16.msra.mxu0 %v618
    %684 = vmatprep.subr.bf16.mxu0 %v621
    %685 = vmatpush1.bf16.msra.mxu0 %v620
    %686 = vmatprep.subr.bf16.mxu0 %v623
    %687 = vmatpush1.bf16.msra.mxu0 %v622
    %688 = vmatprep.mubr.bf16.mxu0 %v421
    %689 = vmatmul.mubr.bf16.gmra.mrb[0].mxu0 %v420
    %v690 = vpop.f32.mrb[0].mxu0
    %v691 = vadd.f32 %v489, %v690
    %v692 = vpop.f32.mrb[0].mxu0
    %v693 = vadd.f32 %v493, %v692
    %v694 = vpop.f32.mrb[0].mxu0
    %v695 = vadd.f32 %v489, %v694
    %v696 = vpop.f32.mrb[0].mxu0
    %v697 = vadd.f32 %v493, %v696
    %698 = vmatprep.mubr.bf16.mxu0 %v423
    %699 = vmatmul.mubr.bf16.gmra.mrb[0].mxu0 %v422
    %v700 = vpop.f32.mrb[0].mxu0
    %v701 = vadd.f32 %v489, %v700
    %v702 = vpop.f32.mrb[0].mxu0
    %v703 = vadd.f32 %v493, %v702
    %v704 = vpop.f32.mrb[0].mxu0
    %v705 = vadd.f32 %v489, %v704
    %v706 = vpop.f32.mrb[0].mxu0
    %v707 = vadd.f32 %v493, %v706
    %708 = vmatprep.mubr.bf16.mxu0 %v425
    %709 = vmatmul.mubr.bf16.gmra.mrb[0].mxu0 %v424
    %v710 = vpop.f32.mrb[0].mxu0
    %v711 = vadd.f32 %v489, %v710
    %v712 = vpop.f32.mrb[0].mxu0
    %v713 = vadd.f32 %v493, %v712
    %v714 = vpop.f32.mrb[0].mxu0
    %v715 = vadd.f32 %v489, %v714
    %v716 = vpop.f32.mrb[0].mxu0
    %v717 = vadd.f32 %v493, %v716
    %718 = vmatprep.mubr.bf16.mxu0 %v427
    %719 = vmatmul.mubr.bf16.gmra.mrb[0].mxu0 %v426
    %v720 = vpop.f32.mrb[0].mxu0
    %v721 = vadd.f32 %v489, %v720
    %v722 = vpop.f32.mrb[0].mxu0
    %v723 = vadd.f32 %v493, %v722
    %v724 = vpop.f32.mrb[0].mxu0
    %v725 = vadd.f32 %v489, %v724
    %v726 = vpop.f32.mrb[0].mxu0
    %v727 = vadd.f32 %v493, %v726
    %728 = vmatprep.mubr.bf16.mxu0 %v429
    %729 = vmatmul.mubr.bf16.gmra.mrb[0].mxu0 %v428
    %v730 = vpop.f32.mrb[0].mxu0
    %v731 = vadd.f32 %v489, %v730
    %v732 = vpop.f32.mrb[0].mxu0
    %v733 = vadd.f32 %v493, %v732
    %v734 = vpop.f32.mrb[0].mxu0
    %v735 = vadd.f32 %v489, %v734
    %v736 = vpop.f32.mrb[0].mxu0
    %v737 = vadd.f32 %v493, %v736
    %738 = vmatprep.mubr.bf16.mxu0 %v431
    %739 = vmatmul.mubr.bf16.gmra.mrb[0].mxu0 %v430
    %v740 = vpop.f32.mrb[0].mxu0
    %v741 = vadd.f32 %v489, %v740
    %v742 = vpop.f32.mrb[0].mxu0
    %v743 = vadd.f32 %v493, %v742
    %v744 = vpop.f32.mrb[0].mxu0
    %v745 = vadd.f32 %v489, %v744
    %v746 = vpop.f32.mrb[0].mxu0
    %v747 = vadd.f32 %v493, %v746
    %748 = vmatprep.mubr.bf16.mxu0 %v433
    %749 = vmatmul.mubr.bf16.gmra.mrb[0].mxu0 %v432
    %v750 = vpop.f32.mrb[0].mxu0
    %v751 = vadd.f32 %v489, %v750
    %v752 = vpop.f32.mrb[0].mxu0
    %v753 = vadd.f32 %v493, %v752
    %v754 = vpop.f32.mrb[0].mxu0
    %v755 = vadd.f32 %v489, %v754
    %v756 = vpop.f32.mrb[0].mxu0
    %v757 = vadd.f32 %v493, %v756
    %758 = vmatprep.mubr.bf16.mxu0 %v435
    %759 = vmatmul.mubr.bf16.gmra.mrb[0].mxu0 %v434
    %v760 = vpop.f32.mrb[0].mxu0
    %v761 = vadd.f32 %v489, %v760
    %v762 = vpop.f32.mrb[0].mxu0
    %v763 = vadd.f32 %v493, %v762
    %v764 = vpop.f32.mrb[0].mxu0
    %v765 = vadd.f32 %v489, %v764
    %v766 = vpop.f32.mrb[0].mxu0
    %v767 = vadd.f32 %v493, %v766
    %768 = vmatprep.mubr.bf16.mxu0 %v437
    %769 = vmatmul.mubr.bf16.gmra.mrb[0].mxu0 %v436
    %v770 = vpop.f32.mrb[0].mxu0
    %v771 = vadd.f32 %v489, %v770
    %v772 = vpop.f32.mrb[0].mxu0
    %v773 = vadd.f32 %v493, %v772
    %v774 = vpop.f32.mrb[0].mxu0
    %v775 = vadd.f32 %v489, %v774
    %v776 = vpop.f32.mrb[0].mxu0
    %v777 = vadd.f32 %v493, %v776
    %778 = vmatprep.mubr.bf16.mxu0 %v439
    %779 = vmatmul.mubr.bf16.gmra.mrb[0].mxu0 %v438
    %v780 = vpop.f32.mrb[0].mxu0
    %v781 = vadd.f32 %v489, %v780
    %v782 = vpop.f32.mrb[0].mxu0
    %v783 = vadd.f32 %v493, %v782
    %v784 = vpop.f32.mrb[0].mxu0
    %v785 = vadd.f32 %v489, %v784
    %v786 = vpop.f32.mrb[0].mxu0
    %v787 = vadd.f32 %v493, %v786
    %788 = vmatprep.mubr.bf16.mxu0 %v441
    %789 = vmatmul.mubr.bf16.gmra.mrb[0].mxu0 %v440
    %v790 = vpop.f32.mrb[0].mxu0
    %v791 = vadd.f32 %v489, %v790
    %v792 = vpop.f32.mrb[0].mxu0
    %v793 = vadd.f32 %v493, %v792
    %v794 = vpop.f32.mrb[0].mxu0
    %v795 = vadd.f32 %v489, %v794
    %v796 = vpop.f32.mrb[0].mxu0
    %v797 = vadd.f32 %v493, %v796
    %798 = vmatprep.mubr.bf16.mxu0 %v443
    %799 = vmatmul.mubr.bf16.gmra.mrb[0].mxu0 %v442
    %v800 = vpop.f32.mrb[0].mxu0
    %v801 = vadd.f32 %v489, %v800
    %v802 = vpop.f32.mrb[0].mxu0
    %v803 = vadd.f32 %v493, %v802
    %v804 = vpop.f32.mrb[0].mxu0
    %v805 = vadd.f32 %v489, %v804
    %v806 = vpop.f32.mrb[0].mxu0
    %v807 = vadd.f32 %v493, %v806
    %808 = vmatprep.mubr.bf16.mxu0 %v445
    %809 = vmatmul.mubr.bf16.gmra.mrb[0].mxu0 %v444
    %v810 = vpop.f32.mrb[0].mxu0
    %v811 = vadd.f32 %v489, %v810
    %v812 = vpop.f32.mrb[0].mxu0
    %v813 = vadd.f32 %v493, %v812
    %v814 = vpop.f32.mrb[0].mxu0
    %v815 = vadd.f32 %v489, %v814
    %v816 = vpop.f32.mrb[0].mxu0
    %v817 = vadd.f32 %v493, %v816
    %818 = vmatprep.mubr.bf16.mxu0 %v447
    %819 = vmatmul.mubr.bf16.gmra.mrb[0].mxu0 %v446
    %v820 = vpop.f32.mrb[0].mxu0
    %v821 = vadd.f32 %v489, %v820
    %v822 = vpop.f32.mrb[0].mxu0
    %v823 = vadd.f32 %v493, %v822
    %v824 = vpop.f32.mrb[0].mxu0
    %v825 = vadd.f32 %v489, %v824
    %v826 = vpop.f32.mrb[0].mxu0
    %v827 = vadd.f32 %v493, %v826
    %828 = vmatprep.mubr.bf16.mxu0 %v449
    %829 = vmatmul.mubr.bf16.gmra.mrb[0].mxu0 %v448
    %v830 = vpop.f32.mrb[0].mxu0
    %v831 = vadd.f32 %v489, %v830
    %v832 = vpop.f32.mrb[0].mxu0
    %v833 = vadd.f32 %v493, %v832
    %v834 = vpop.f32.mrb[0].mxu0
    %v835 = vadd.f32 %v489, %v834
    %v836 = vpop.f32.mrb[0].mxu0
    %v837 = vadd.f32 %v493, %v836
    %838 = vmatprep.mubr.bf16.mxu0 %v451
    %839 = vmatmul.mubr.bf16.gmra.mrb[0].mxu0 %v450
    %v840 = vpop.f32.mrb[0].mxu0
    %v841 = vadd.f32 %v489, %v840
    %v842 = vpop.f32.mrb[0].mxu0
    %v843 = vadd.f32 %v493, %v842
    %v844 = vpop.f32.mrb[0].mxu0
    %v845 = vadd.f32 %v489, %v844
    %v846 = vpop.f32.mrb[0].mxu0
    %v847 = vadd.f32 %v493, %v846
    %848 = vdwg.mxu0
    %v849 = vmax.f32 %v691, 0.0
    %v850 = vmax.f32 %v693, 0.0
    %v851 = vmax.f32 %v695, 0.0
    %v852 = vmax.f32 %v697, 0.0
    %v853 = vmax.f32 %v701, 0.0
    %v854 = vmax.f32 %v703, 0.0
    %v855 = vmax.f32 %v705, 0.0
    %v856 = vmax.f32 %v707, 0.0
    %v857 = vmax.f32 %v711, 0.0
    %v858 = vmax.f32 %v713, 0.0
    %v859 = vmax.f32 %v715, 0.0
    %v860 = vmax.f32 %v717, 0.0
    %v861 = vmax.f32 %v721, 0.0
    %v862 = vmax.f32 %v723, 0.0
    %v863 = vmax.f32 %v725, 0.0
    %v864 = vmax.f32 %v727, 0.0
    %v865 = vmax.f32 %v731, 0.0
    %v866 = vmax.f32 %v733, 0.0
    %v867 = vmax.f32 %v735, 0.0
    %v868 = vmax.f32 %v737, 0.0
    %v869 = vmax.f32 %v741, 0.0
    %v870 = vmax.f32 %v743, 0.0
    %v871 = vmax.f32 %v745, 0.0
    %v872 = vmax.f32 %v747, 0.0
    %v873 = vmax.f32 %v751, 0.0
    %v874 = vmax.f32 %v753, 0.0
    %v875 = vmax.f32 %v755, 0.0
    %v876 = vmax.f32 %v757, 0.0
    %v877 = vmax.f32 %v761, 0.0
    %v878 = vmax.f32 %v763, 0.0
    %v879 = vmax.f32 %v765, 0.0
    %v880 = vmax.f32 %v767, 0.0
    %v881 = vmax.f32 %v771, 0.0
    %v882 = vmax.f32 %v773, 0.0
    %v883 = vmax.f32 %v775, 0.0
    %v884 = vmax.f32 %v777, 0.0
    %v885 = vmax.f32 %v781, 0.0
    %v886 = vmax.f32 %v783, 0.0
    %v887 = vmax.f32 %v785, 0.0
    %v888 = vmax.f32 %v787, 0.0
    %v889 = vmax.f32 %v791, 0.0
    %v890 = vmax.f32 %v793, 0.0
    %v891 = vmax.f32 %v795, 0.0
    %v892 = vmax.f32 %v797, 0.0
    %v893 = vmax.f32 %v801, 0.0
    %v894 = vmax.f32 %v803, 0.0
    %v895 = vmax.f32 %v805, 0.0
    %v896 = vmax.f32 %v807, 0.0
    %v897 = vmax.f32 %v811, 0.0
    %v898 = vmax.f32 %v813, 0.0
    %v899 = vmax.f32 %v815, 0.0
    %v900 = vmax.f32 %v817, 0.0
    %v901 = vmax.f32 %v821, 0.0
    %v902 = vmax.f32 %v823, 0.0
    %v903 = vmax.f32 %v825, 0.0
    %v904 = vmax.f32 %v827, 0.0
    %v905 = vmax.f32 %v831, 0.0
    %v906 = vmax.f32 %v833, 0.0
    %v907 = vmax.f32 %v835, 0.0
    %v908 = vmax.f32 %v837, 0.0
    %v909 = vmax.f32 %v841, 0.0
    %v910 = vmax.f32 %v843, 0.0
    %v911 = vmax.f32 %v845, 0.0
    %v912 = vmax.f32 %v847, 0.0
    %v913 = vpack.c.bf16 %v851, %v849
    %v914 = vpack.c.bf16 %v852, %v850
    %v915 = vpack.c.bf16 %v855, %v853
    %v916 = vpack.c.bf16 %v856, %v854
    %v917 = vpack.c.bf16 %v859, %v857
    %v918 = vpack.c.bf16 %v860, %v858
    %v919 = vpack.c.bf16 %v863, %v861
    %v920 = vpack.c.bf16 %v864, %v862
    %v921 = vpack.c.bf16 %v867, %v865
    %v922 = vpack.c.bf16 %v868, %v866
    %v923 = vpack.c.bf16 %v871, %v869
    %v924 = vpack.c.bf16 %v872, %v870
    %v925 = vpack.c.bf16 %v875, %v873
    %v926 = vpack.c.bf16 %v876, %v874
    %v927 = vpack.c.bf16 %v879, %v877
    %v928 = vpack.c.bf16 %v880, %v878
    %v929 = vpack.c.bf16 %v883, %v881
    %v930 = vpack.c.bf16 %v884, %v882
    %v931 = vpack.c.bf16 %v887, %v885
    %v932 = vpack.c.bf16 %v888, %v886
    %v933 = vpack.c.bf16 %v891, %v889
    %v934 = vpack.c.bf16 %v892, %v890
    %v935 = vpack.c.bf16 %v895, %v893
    %v936 = vpack.c.bf16 %v896, %v894
    %v937 = vpack.c.bf16 %v899, %v897
    %v938 = vpack.c.bf16 %v900, %v898
    %v939 = vpack.c.bf16 %v903, %v901
    %v940 = vpack.c.bf16 %v904, %v902
    %v941 = vpack.c.bf16 %v907, %v905
    %v942 = vpack.c.bf16 %v908, %v906
    %v943 = vpack.c.bf16 %v911, %v909
    %v944 = vpack.c.bf16 %v912, %v910
    %v945 = vld [vmem:[#allocation2] sm:$0xf]
    %v946 = vld [vmem:[#allocation2 + $0x4] sm:$0xf]
    %v947 = vld [vmem:[#allocation2 + $0x8] sm:$0xf]
    %v948 = vld [vmem:[#allocation2 + $0xc] sm:$0xf]
    %v949 = vld [vmem:[#allocation2 + $0x10] sm:$0xf]
    %v950 = vld [vmem:[#allocation2 + $0x14] sm:$0xf]
    %v951 = vld [vmem:[#allocation2 + $0x18] sm:$0xf]
    %v952 = vld [vmem:[#allocation2 + $0x1c] sm:$0xf]
    %v953 = vld [vmem:[#allocation2 + $0x20] sm:$0xf]
    %v954 = vld [vmem:[#allocation2 + $0x24] sm:$0xf]
    %v955 = vld [vmem:[#allocation2 + $0x28] sm:$0xf]
    %v956 = vld [vmem:[#allocation2 + $0x2c] sm:$0xf]
    %v957 = vld [vmem:[#allocation2 + $0x30] sm:$0xf]
    %v958 = vld [vmem:[#allocation2 + $0x34] sm:$0xf]
    %v959 = vld [vmem:[#allocation2 + $0x38] sm:$0xf]
    %v960 = vld [vmem:[#allocation2 + $0x3c] sm:$0xf]
    %v961 = vld [vmem:[#allocation2 + $0x40] sm:$0xf]
    %v962 = vld [vmem:[#allocation2 + $0x44] sm:$0xf]
    %v963 = vld [vmem:[#allocation2 + $0x48] sm:$0xf]
    %v964 = vld [vmem:[#allocation2 + $0x4c] sm:$0xf]
    %v965 = vld [vmem:[#allocation2 + $0x50] sm:$0xf]
    %v966 = vld [vmem:[#allocation2 + $0x54] sm:$0xf]
    %v967 = vld [vmem:[#allocation2 + $0x58] sm:$0xf]
    %v968 = vld [vmem:[#allocation2 + $0x5c] sm:$0xf]
    %v969 = vld [vmem:[#allocation2 + $0x60] sm:$0xf]
    %v970 = vld [vmem:[#allocation2 + $0x64] sm:$0xf]
    %v971 = vld [vmem:[#allocation2 + $0x68] sm:$0xf]
    %v972 = vld [vmem:[#allocation2 + $0x6c] sm:$0xf]
    %v973 = vld [vmem:[#allocation2 + $0x70] sm:$0xf]
    %v974 = vld [vmem:[#allocation2 + $0x74] sm:$0xf]
    %v975 = vld [vmem:[#allocation2 + $0x78] sm:$0xf]
    %v976 = vld [vmem:[#allocation2 + $0x7c] sm:$0xf]
    %v977 = vld [vmem:[%s6] sm:$0x1]
    %v979 = vlaneseq
    %v980 = vshrl.u32 %v979, 7
    %v981 = vsub.s32 0, %v980
    %v982 = vrot.slane %v977, %v981
    %v1016 = vunpack.c.l.b16 %v945
    %v1017 = vunpack.c.l.b16 %v946
    %v1018 = vunpack.c.l.b16 %v947
    %v1019 = vunpack.c.l.b16 %v948
    %v1020 = vunpack.c.l.b16 %v949
    %v1021 = vunpack.c.l.b16 %v950
    %v1022 = vunpack.c.l.b16 %v951
    %v1023 = vunpack.c.l.b16 %v952
    %v1024 = vunpack.c.l.b16 %v953
    %v1025 = vunpack.c.l.b16 %v954
    %v1026 = vunpack.c.l.b16 %v955
    %v1027 = vunpack.c.l.b16 %v956
    %v1028 = vunpack.c.l.b16 %v957
    %v1029 = vunpack.c.l.b16 %v958
    %v1030 = vunpack.c.l.b16 %v959
    %v1031 = vunpack.c.l.b16 %v960
    %v1032 = vunpack.c.l.b16 %v961
    %v1033 = vunpack.c.l.b16 %v962
    %v1034 = vunpack.c.l.b16 %v963
    %v1035 = vunpack.c.l.b16 %v964
    %v1036 = vunpack.c.l.b16 %v965
    %v1037 = vunpack.c.l.b16 %v966
    %v1038 = vunpack.c.l.b16 %v967
    %v1039 = vunpack.c.l.b16 %v968
    %v1040 = vunpack.c.l.b16 %v969
    %v1041 = vunpack.c.l.b16 %v970
    %v1042 = vunpack.c.l.b16 %v971
    %v1043 = vunpack.c.l.b16 %v972
    %v1044 = vunpack.c.l.b16 %v973
    %v1045 = vunpack.c.l.b16 %v974
    %v1046 = vunpack.c.l.b16 %v975
    %v1047 = vunpack.c.l.b16 %v976
    %v1048 = vpack.c.b16 %v1017, %v1016
    %v1049 = vpack.c.b16 %v1019, %v1018
    %v1050 = vpack.c.b16 %v1021, %v1020
    %v1051 = vpack.c.b16 %v1023, %v1022
    %v1052 = vpack.c.b16 %v1025, %v1024
    %v1053 = vpack.c.b16 %v1027, %v1026
    %v1054 = vpack.c.b16 %v1029, %v1028
    %v1055 = vpack.c.b16 %v1031, %v1030
    %v1056 = vpack.c.b16 %v1033, %v1032
    %v1057 = vpack.c.b16 %v1035, %v1034
    %v1058 = vpack.c.b16 %v1037, %v1036
    %v1059 = vpack.c.b16 %v1039, %v1038
    %v1060 = vpack.c.b16 %v1041, %v1040
    %v1061 = vpack.c.b16 %v1043, %v1042
    %v1062 = vpack.c.b16 %v1045, %v1044
    %v1063 = vpack.c.b16 %v1047, %v1046
    %1080 = vmatprep.subr.bf16.mxu0 0
    %1081 = vmatpush1.bf16.msra.mxu0 %v1048
    %1082 = vmatprep.subr.bf16.mxu0 0
    %1083 = vmatpush1.bf16.msra.mxu0 %v1049
    %1084 = vmatprep.subr.bf16.mxu0 0
    %1085 = vmatpush1.bf16.msra.mxu0 %v1050
    %1086 = vmatprep.subr.bf16.mxu0 0
    %1087 = vmatpush1.bf16.msra.mxu0 %v1051
    %1088 = vmatprep.subr.bf16.mxu0 0
    %1089 = vmatpush1.bf16.msra.mxu0 %v1052
    %1090 = vmatprep.subr.bf16.mxu0 0
    %1091 = vmatpush1.bf16.msra.mxu0 %v1053
    %1092 = vmatprep.subr.bf16.mxu0 0
    %1093 = vmatpush1.bf16.msra.mxu0 %v1054
    %1094 = vmatprep.subr.bf16.mxu0 0
    %1095 = vmatpush1.bf16.msra.mxu0 %v1055
    %1096 = vmatprep.subr.bf16.mxu0 0
    %1097 = vmatpush1.bf16.msra.mxu0 %v1056
    %1098 = vmatprep.subr.bf16.mxu0 0
    %1099 = vmatpush1.bf16.msra.mxu0 %v1057
    %1100 = vmatprep.subr.bf16.mxu0 0
    %1101 = vmatpush1.bf16.msra.mxu0 %v1058
    %1102 = vmatprep.subr.bf16.mxu0 0
    %1103 = vmatpush1.bf16.msra.mxu0 %v1059
    %1104 = vmatprep.subr.bf16.mxu0 0
    %1105 = vmatpush1.bf16.msra.mxu0 %v1060
    %1106 = vmatprep.subr.bf16.mxu0 0
    %1107 = vmatpush1.bf16.msra.mxu0 %v1061
    %1108 = vmatprep.subr.bf16.mxu0 0
    %1109 = vmatpush1.bf16.msra.mxu0 %v1062
    %1110 = vmatprep.subr.bf16.mxu0 0
    %1111 = vmatpush1.bf16.msra.mxu0 %v1063
    %1112 = vmatprep.mubr.bf16.mxu0 %v914
    %1113 = vmatmul.mubr.bf16.gmra.mrb[0].mxu0 %v913
    %v1114 = vpop.f32.mrb[0].mxu0
    %v1115 = vadd.f32 %v982, %v1114
    %v1116 = vpop.f32.mrb[0].mxu0
    %v1117 = vpop.f32.mrb[0].mxu0
    %v1118 = vadd.f32 %v982, %v1117
    %v1119 = vpop.f32.mrb[0].mxu0
    %1120 = vmatprep.mubr.bf16.mxu0 %v916
    %1121 = vmatmul.mubr.bf16.gmra.mrb[0].mxu0 %v915
    %v1122 = vpop.f32.mrb[0].mxu0
    %v1123 = vadd.f32 %v982, %v1122
    %v1124 = vpop.f32.mrb[0].mxu0
    %v1125 = vpop.f32.mrb[0].mxu0
    %v1126 = vadd.f32 %v982, %v1125
    %v1127 = vpop.f32.mrb[0].mxu0
    %1128 = vmatprep.mubr.bf16.mxu0 %v918
    %1129 = vmatmul.mubr.bf16.gmra.mrb[0].mxu0 %v917
    %v1130 = vpop.f32.mrb[0].mxu0
    %v1131 = vadd.f32 %v982, %v1130
    %v1132 = vpop.f32.mrb[0].mxu0
    %v1133 = vpop.f32.mrb[0].mxu0
    %v1134 = vadd.f32 %v982, %v1133
    %v1135 = vpop.f32.mrb[0].mxu0
    %1136 = vmatprep.mubr.bf16.mxu0 %v920
    %1137 = vmatmul.mubr.bf16.gmra.mrb[0].mxu0 %v919
    %v1138 = vpop.f32.mrb[0].mxu0
    %v1139 = vadd.f32 %v982, %v1138
    %v1140 = vpop.f32.mrb[0].mxu0
    %v1141 = vpop.f32.mrb[0].mxu0
    %v1142 = vadd.f32 %v982, %v1141
    %v1143 = vpop.f32.mrb[0].mxu0
    %1144 = vmatprep.mubr.bf16.mxu0 %v922
    %1145 = vmatmul.mubr.bf16.gmra.mrb[0].mxu0 %v921
    %v1146 = vpop.f32.mrb[0].mxu0
    %v1147 = vadd.f32 %v982, %v1146
    %v1148 = vpop.f32.mrb[0].mxu0
    %v1149 = vpop.f32.mrb[0].mxu0
    %v1150 = vadd.f32 %v982, %v1149
    %v1151 = vpop.f32.mrb[0].mxu0
    %1152 = vmatprep.mubr.bf16.mxu0 %v924
    %1153 = vmatmul.mubr.bf16.gmra.mrb[0].mxu0 %v923
    %v1154 = vpop.f32.mrb[0].mxu0
    %v1155 = vadd.f32 %v982, %v1154
    %v1156 = vpop.f32.mrb[0].mxu0
    %v1157 = vpop.f32.mrb[0].mxu0
    %v1158 = vadd.f32 %v982, %v1157
    %v1159 = vpop.f32.mrb[0].mxu0
    %1160 = vmatprep.mubr.bf16.mxu0 %v926
    %1161 = vmatmul.mubr.bf16.gmra.mrb[0].mxu0 %v925
    %v1162 = vpop.f32.mrb[0].mxu0
    %v1163 = vadd.f32 %v982, %v1162
    %v1164 = vpop.f32.mrb[0].mxu0
    %v1165 = vpop.f32.mrb[0].mxu0
    %v1166 = vadd.f32 %v982, %v1165
    %v1167 = vpop.f32.mrb[0].mxu0
    %1168 = vmatprep.mubr.bf16.mxu0 %v928
    %1169 = vmatmul.mubr.bf16.gmra.mrb[0].mxu0 %v927
    %v1170 = vpop.f32.mrb[0].mxu0
    %v1171 = vadd.f32 %v982, %v1170
    %v1172 = vpop.f32.mrb[0].mxu0
    %v1173 = vpop.f32.mrb[0].mxu0
    %v1174 = vadd.f32 %v982, %v1173
    %v1175 = vpop.f32.mrb[0].mxu0
    %1176 = vmatprep.mubr.bf16.mxu0 %v930
    %1177 = vmatmul.mubr.bf16.gmra.mrb[0].mxu0 %v929
    %v1178 = vpop.f32.mrb[0].mxu0
    %v1179 = vadd.f32 %v982, %v1178
    %v1180 = vpop.f32.mrb[0].mxu0
    %v1181 = vpop.f32.mrb[0].mxu0
    %v1182 = vadd.f32 %v982, %v1181
    %v1183 = vpop.f32.mrb[0].mxu0
    %1184 = vmatprep.mubr.bf16.mxu0 %v932
    %1185 = vmatmul.mubr.bf16.gmra.mrb[0].mxu0 %v931
    %v1186 = vpop.f32.mrb[0].mxu0
    %v1187 = vadd.f32 %v982, %v1186
    %v1188 = vpop.f32.mrb[0].mxu0
    %v1189 = vpop.f32.mrb[0].mxu0
    %v1190 = vadd.f32 %v982, %v1189
    %v1191 = vpop.f32.mrb[0].mxu0
    %1192 = vmatprep.mubr.bf16.mxu0 %v934
    %1193 = vmatmul.mubr.bf16.gmra.mrb[0].mxu0 %v933
    %v1194 = vpop.f32.mrb[0].mxu0
    %v1195 = vadd.f32 %v982, %v1194
    %v1196 = vpop.f32.mrb[0].mxu0
    %v1197 = vpop.f32.mrb[0].mxu0
    %v1198 = vadd.f32 %v982, %v1197
    %v1199 = vpop.f32.mrb[0].mxu0
    %1200 = vmatprep.mubr.bf16.mxu0 %v936
    %1201 = vmatmul.mubr.bf16.gmra.mrb[0].mxu0 %v935
    %v1202 = vpop.f32.mrb[0].mxu0
    %v1203 = vadd.f32 %v982, %v1202
    %v1204 = vpop.f32.mrb[0].mxu0
    %v1205 = vpop.f32.mrb[0].mxu0
    %v1206 = vadd.f32 %v982, %v1205
    %v1207 = vpop.f32.mrb[0].mxu0
    %1208 = vmatprep.mubr.bf16.mxu0 %v938
    %1209 = vmatmul.mubr.bf16.gmra.mrb[0].mxu0 %v937
    %v1210 = vpop.f32.mrb[0].mxu0
    %v1211 = vadd.f32 %v982, %v1210
    %v1212 = vpop.f32.mrb[0].mxu0
    %v1213 = vpop.f32.mrb[0].mxu0
    %v1214 = vadd.f32 %v982, %v1213
    %v1215 = vpop.f32.mrb[0].mxu0
    %1216 = vmatprep.mubr.bf16.mxu0 %v940
    %1217 = vmatmul.mubr.bf16.gmra.mrb[0].mxu0 %v939
    %v1218 = vpop.f32.mrb[0].mxu0
    %v1219 = vadd.f32 %v982, %v1218
    %v1220 = vpop.f32.mrb[0].mxu0
    %v1221 = vpop.f32.mrb[0].mxu0
    %v1222 = vadd.f32 %v982, %v1221
    %v1223 = vpop.f32.mrb[0].mxu0
    %1224 = vmatprep.mubr.bf16.mxu0 %v942
    %1225 = vmatmul.mubr.bf16.gmra.mrb[0].mxu0 %v941
    %v1226 = vpop.f32.mrb[0].mxu0
    %v1227 = vadd.f32 %v982, %v1226
    %v1228 = vpop.f32.mrb[0].mxu0
    %v1229 = vpop.f32.mrb[0].mxu0
    %v1230 = vadd.f32 %v982, %v1229
    %v1231 = vpop.f32.mrb[0].mxu0
    %1232 = vmatprep.mubr.bf16.mxu0 %v944
    %1233 = vmatmul.mubr.bf16.gmra.mrb[0].mxu0 %v943
    %v1234 = vpop.f32.mrb[0].mxu0
    %v1235 = vadd.f32 %v982, %v1234
    %v1236 = vpop.f32.mrb[0].mxu0
    %v1237 = vpop.f32.mrb[0].mxu0
    %v1238 = vadd.f32 %v982, %v1237
    %v1239 = vpop.f32.mrb[0].mxu0
    %1240 = vdwg.mxu0
    %1241 = vst [vmem:[#allocation5] sm:$0xff] %v1115
    %1242 = vst [vmem:[#allocation5 + $0x8] sm:$0xff] %v1118
    %1243 = vst [vmem:[#allocation5 + $0x10] sm:$0xff] %v1123
    %1244 = vst [vmem:[#allocation5 + $0x18] sm:$0xff] %v1126
    %1245 = vst [vmem:[#allocation5 + $0x20] sm:$0xff] %v1131
    %1246 = vst [vmem:[#allocation5 + $0x28] sm:$0xff] %v1134
    %1247 = vst [vmem:[#allocation5 + $0x30] sm:$0xff] %v1139
    %1248 = vst [vmem:[#allocation5 + $0x38] sm:$0xff] %v1142
    %1249 = vst [vmem:[#allocation5 + $0x40] sm:$0xff] %v1147
    %1250 = vst [vmem:[#allocation5 + $0x48] sm:$0xff] %v1150
    %1251 = vst [vmem:[#allocation5 + $0x50] sm:$0xff] %v1155
    %1252 = vst [vmem:[#allocation5 + $0x58] sm:$0xff] %v1158
    %1253 = vst [vmem:[#allocation5 + $0x60] sm:$0xff] %v1163
    %1254 = vst [vmem:[#allocation5 + $0x68] sm:$0xff] %v1166
    %1255 = vst [vmem:[#allocation5 + $0x70] sm:$0xff] %v1171
    %1256 = vst [vmem:[#allocation5 + $0x78] sm:$0xff] %v1174
    %1257 = vst [vmem:[#allocation5 + $0x80] sm:$0xff] %v1179
    %1258 = vst [vmem:[#allocation5 + $0x88] sm:$0xff] %v1182
    %1259 = vst [vmem:[#allocation5 + $0x90] sm:$0xff] %v1187
    %1260 = vst [vmem:[#allocation5 + $0x98] sm:$0xff] %v1190
    %1261 = vst [vmem:[#allocation5 + $0xa0] sm:$0xff] %v1195
    %1262 = vst [vmem:[#allocation5 + $0xa8] sm:$0xff] %v1198
    %1263 = vst [vmem:[#allocation5 + $0xb0] sm:$0xff] %v1203
    %1264 = vst [vmem:[#allocation5 + $0xb8] sm:$0xff] %v1206
    %1265 = vst [vmem:[#allocation5 + $0xc0] sm:$0xff] %v1211
    %1266 = vst [vmem:[#allocation5 + $0xc8] sm:$0xff] %v1214
    %1267 = vst [vmem:[#allocation5 + $0xd0] sm:$0xff] %v1219
    %1268 = vst [vmem:[#allocation5 + $0xd8] sm:$0xff] %v1222
    %1269 = vst [vmem:[#allocation5 + $0xe0] sm:$0xff] %v1227
    %1270 = vst [vmem:[#allocation5 + $0xe8] sm:$0xff] %v1230
    %1271 = vst [vmem:[#allocation5 + $0xf0] sm:$0xff] %v1235
    %1272 = vst [vmem:[#allocation5 + $0xf8] sm:$0xff] %v1238
    // Predicated region
    $region34: #{tpu_custom_call.1} parent=1 // pred_check
      _
    $region35: #{tpu_custom_call.1} parent=1 // pred_check_branch
      %1274 = sbr.rel (0) target = $region37
    $region36: #{tpu_custom_call.1} parent=1 // pred_region
      %s1276 = ssub.s32 4096, 4096
      %1277 = vsyncadd [#allocation4], %s1276
      %s1278 = sshll.u32 [#allocation5], 4
      %s1279 = int_to_ptr.vmem [resolvable:$true] %s1278
      %1284 = dma.vmem_to_hbm [thread:$0]  %s1279, 4096, %s7, [#allocation4], 128, 128, 8
    $region37: #{tpu_custom_call.1} parent=1 // pred_fallthru
      _
    // Predicated region
    $region38: #{tpu_custom_call.1} parent=1 // pred_check
      _
    $region39: #{tpu_custom_call.1} parent=1 // pred_check_branch
      %1286 = sbr.rel (0) target = $region41
    $region40: #{tpu_custom_call.1} parent=1 // pred_region
      %1287 = dma.done [#allocation4], 4096
    $region41: #{tpu_custom_call.1} parent=1 // pred_fallthru
      _
    %1288 = vsyncpa [#allocation3], 1
    %1289 = vsyncpa [#allocation4], 1

</llo_original>
